<compile_context>
chip_gen: v7x
topology: tpu7x:2x2x1
jax: 0.10.0
libtpu: 0.0.40
codegen_flags: <defaults>
</compile_context>

<pallas_src>
import functools

import jax
import jax.numpy as jnp
from jax.experimental import pallas as pl
from jax.experimental.pallas import tpu as pltpu


# ----------------------------------------------------------------------------
# Fused kernel: conv1(3x3,pad=1)+ReLU -> maxpool(3x3,s=1) -> deconv(3x3)+ReLU
# ----------------------------------------------------------------------------
def _g_fused_kernel(xcol_ref, w1_ref, b1_ref, w2_ref, b2_ref, mask_ref, o_ref,
                    *, h, w):
    """One batch element per grid step.  Flat spatial index p = r*(W+2) + c.

    xcol_ref: (1, 32, L)   bf16  conv1 im2col, row=(kh*3+kw)*3+cin (padded to 32)
    w1_ref:   (64, 32)     bf16  conv1 weight
    b1_ref:   (64, 1)      f32
    w2_ref:   (288, 64)    bf16  deconv-as-conv weight, row = tap*32 + cout
    b2_ref:   (32, 1)      f32
    mask_ref: (1, L)       f32   1.0 at valid pooled positions, 0.0 at garbage
    o_ref:    (1, 32, L)   f32   channels-leading output (lane-dense store)
    """
    wp = w + 2
    l1 = h * wp                    # flat spatial extent (Wp-strided layout)
    lm = l1 - 2 * wp - 2           # pooled-activation extent in that layout

    # ---- encoder: conv1 as one MXU matmul, bias + ReLU lane-dense in f32 ----
    y1 = jnp.dot(w1_ref[...], xcol_ref[0],
                 preferred_element_type=jnp.float32)             # (64, L) f32
    y1 = jnp.maximum(y1 + b1_ref[...], 0.0)

    # ---- encoder: separable 3x3 stride-1 max pool via flat lane shifts ------
    rm = jnp.maximum(jnp.maximum(y1[:, 0:l1 - 2], y1[:, 1:l1 - 1]), y1[:, 2:l1])
    m = jnp.maximum(jnp.maximum(rm[:, 0:lm], rm[:, wp:wp + lm]),
                    rm[:, 2 * wp:2 * wp + lm])                   # (64, Lm) f32

    # Zero the positions that are pool garbage (row-wrap columns / bottom
    # rows); in the padded buffer below they land exactly on the zero border.
    m = (m * mask_ref[:, 0:lm]).astype(jnp.bfloat16)

    # ---- zero-pad (pad=2) in the same flat layout: one shifted placement ----
    zpad = jnp.zeros((64, 2 * wp + 2), jnp.bfloat16)
    pad_flat = jnp.concatenate([zpad, m, zpad], axis=1)          # (64, L+2Wp+2)

    # ---- decoder: ConvTranspose2d as full conv, 9-tap MXU accumulation ------
    acc = jnp.zeros((32, l1), jnp.float32)
    for tap in range(9):
        kh, kw = divmod(tap, 3)
        off = kh * wp + kw
        acc = acc + jnp.dot(w2_ref[tap * 32:(tap + 1) * 32, :],
                            pad_flat[:, off:off + l1],
                            preferred_element_type=jnp.float32)  # (32, L)

    o_ref[0] = jnp.maximum(acc + b2_ref[...], 0.0)               # lane-dense


# ----------------------------------------------------------------------------
# Parameters (match PyTorch layer shapes)
# ----------------------------------------------------------------------------
def init_params(key):
    k1, k2, k3, k4 = jax.random.split(key, 4)
    # Conv2d(3, 64, 3): weight OIHW (64, 3, 3, 3), bias (64,)
    w_conv_oihw = jax.random.normal(k1, (64, 3, 3, 3), jnp.float32) * 0.1
    b_conv = jax.random.normal(k2, (64,), jnp.float32) * 0.1
    # ConvTranspose2d(64, 31, 3): weight IOHW (64, 31, 3, 3), bias (31,)
    w_deconv_iohw = jax.random.normal(k3, (64, 31, 3, 3), jnp.float32) * 0.1
    b_deconv = jax.random.normal(k4, (31,), jnp.float32) * 0.1
    return {"w_conv_oihw": w_conv_oihw, "b_conv": b_conv,
            "w_deconv_iohw": w_deconv_iohw, "b_deconv": b_deconv}


# ----------------------------------------------------------------------------
# Forward pass
# ----------------------------------------------------------------------------
def g_forward(x_nchw, params):
    """x_nchw: (N, 3, H, W) f32  ->  (N, 31, H, W) f32."""
    n, cin, h, w = x_nchw.shape
    wp = w + 2
    l1 = h * wp
    kc = 32                              # conv1 contraction dim (9*cin=27 -> 32)

    # conv1 im2col in the Wp-strided flat layout: column r*Wp + c holds the
    # 27 taps of output pixel (r, c); columns c in {W, W+1} are zero (unused).
    # TODO(synk): build these patches in-VMEM for large images (9x HBM blowup).
    xp = jnp.pad(x_nchw, ((0, 0), (0, 0), (1, 1), (1, 1)))       # (N,3,H+2,W+2)
    patches = [xp[:, :, kh:kh + h, kw:kw + w]
               for kh in range(3) for kw in range(3)]
    xcol = jnp.stack(patches, axis=1)                            # (N,9,3,H,W)
    xcol = jnp.pad(xcol, ((0, 0), (0, 0), (0, 0), (0, 0), (0, 2)))
    xcol = xcol.reshape(n, 9 * cin, l1)
    xcol = jnp.pad(xcol, ((0, 0), (0, kc - 9 * cin), (0, 0))).astype(jnp.bfloat16)

    # conv1 weight OIHW (64,3,3,3) -> (64, 27), col=(kh*3+kw)*3+cin -> pad K=32
    w1 = jnp.transpose(params["w_conv_oihw"], (0, 2, 3, 1)).reshape(64, 9 * cin)
    w1 = jnp.pad(w1, ((0, 0), (0, kc - 9 * cin))).astype(jnp.bfloat16)
    b1 = params["b_conv"].reshape(64, 1).astype(jnp.float32)

    # deconv weight IOHW (64,31,3,3) -> full-conv weight (flip + IO swap),
    # packed tap-major on sublanes: (288, 64), row = (kh*3+kw)*32 + cout.
    wt = params["w_deconv_iohw"]
    w2 = jnp.transpose(wt[:, :, ::-1, ::-1], (2, 3, 1, 0))       # (3,3,31,64)
    w2 = jnp.pad(w2, ((0, 0), (0, 0), (0, 1), (0, 0)))           # Cout 31 -> 32
    w2 = w2.reshape(9 * 32, 64).astype(jnp.bfloat16)
    b2 = jnp.pad(params["b_deconv"], (0, 1)).reshape(32, 1).astype(jnp.float32)

    # pool-validity mask in the flat layout (valid: r <= H-3 and c <= W-3)
    pidx = jnp.arange(l1)
    mask = (((pidx % wp) <= w - 3) & ((pidx // wp) <= h - 3))
    mask = mask.astype(jnp.float32).reshape(1, l1)

    out = pl.pallas_call(
        functools.partial(_g_fused_kernel, h=h, w=w),
        out_shape=jax.ShapeDtypeStruct((n, 32, l1), jnp.float32),
        grid_spec=pltpu.PrefetchScalarGridSpec(
            num_scalar_prefetch=0,
            grid=(n,),
            in_specs=[
                pl.BlockSpec((1, kc, l1), lambda i: (i, 0, 0)),
                pl.BlockSpec((64, kc), lambda i: (0, 0)),
                pl.BlockSpec((64, 1), lambda i: (0, 0)),
                pl.BlockSpec((9 * 32, 64), lambda i: (0, 0)),
                pl.BlockSpec((32, 1), lambda i: (0, 0)),
                pl.BlockSpec((1, l1), lambda i: (0, 0)),
            ],
            out_specs=pl.BlockSpec((1, 32, l1), lambda i: (i, 0, 0)),
        ),
        compiler_params=pltpu.CompilerParams(
            dimension_semantics=("parallel",),
            vmem_limit_bytes=32 * 1024 * 1024,
        ),
    )(xcol, w1, b1, w2, b2, mask)

    # Strip the padded Cout channel and the 2 garbage columns per row.
    return out.reshape(n, 32, h, wp)[:, :31, :, :w]


# ----------------------------------------------------------------------------
# Pure-XLA reference (independent of the kernel's layouts / weight packing)
# ----------------------------------------------------------------------------
def g_reference(x_nchw, p):
    y = jax.lax.conv_general_dilated(
        x_nchw, p["w_conv_oihw"], window_strides=(1, 1),
        padding=((1, 1), (1, 1)), dimension_numbers=("NCHW", "OIHW", "NCHW"))
    y = jax.nn.relu(y + p["b_conv"][None, :, None, None])
    y = jax.lax.reduce_window(y, -jnp.inf, jax.lax.max,
                              (1, 1, 3, 3), (1, 1, 1, 1), "VALID")
    # ConvTranspose2d(stride=1, pad=0) == full conv with flipped, IO-swapped weights
    wt = p["w_deconv_iohw"]
    w_eq = jnp.transpose(wt[:, :, ::-1, ::-1], (1, 0, 2, 3))     # OIHW (31,64,3,3)
    z = jax.lax.conv_general_dilated(
        y, w_eq, window_strides=(1, 1), padding=((2, 2), (2, 2)),
        dimension_numbers=("NCHW", "OIHW", "NCHW"))
    return jax.nn.relu(z + p["b_deconv"][None, :, None, None])


# ----------------------------------------------------------------------------
if __name__ == "__main__":
    key = jax.random.PRNGKey(0)
    pkey, xkey = jax.random.split(key)
    params = init_params(pkey)

    # Small input consistent with the module: NCHW, 3 input channels.
    x = jax.random.normal(xkey, (2, 3, 16, 16), jnp.float32)

    out = jax.jit(g_forward)(x, params)
    out = jax.block_until_ready(out)

    assert out.shape == (2, 31, 16, 16), out.shape
    assert out.dtype == jnp.float32
    assert bool(jnp.all(out >= 0.0))          # final ReLU

    # Numerical check vs XLA reference (bf16 MXU inputs -> loose tolerance).
    ref = g_reference(x, params)
    max_err = float(jnp.max(jnp.abs(out - ref)))
    assert max_err < 0.1, f"max abs err vs reference: {max_err}"

    print("KERNEL_OK")
</pallas_src>

<mosaic_0001>
module attributes {stable_mosaic.version = 11 : i64} {
  func.func @_g_fused_kernel(%arg0: i32, %arg1: memref<1x32x288xbf16, #tpu.memory_space<vmem>>, %arg2: memref<64x32xbf16, #tpu.memory_space<vmem>>, %arg3: memref<64x1xf32, #tpu.memory_space<vmem>>, %arg4: memref<288x64xbf16, #tpu.memory_space<vmem>>, %arg5: memref<32x1xf32, #tpu.memory_space<vmem>>, %arg6: memref<1x288xf32, #tpu.memory_space<vmem>>, %arg7: memref<1x32x288xf32, #tpu.memory_space<vmem>>) attributes {dimension_semantics = [#tpu.dimension_semantics<parallel>], iteration_bounds = array<i64: 2>, scalar_prefetch = 0 : i64, scratch_operands = 0 : i64, tpu.core_type = #tpu.core_type<tc>, window_params = [{transform_indices = @transform_0, window_bounds = array<i64: 1, 32, 288>}, {pipeline_mode = #tpu.pipeline_mode<synchronous>, transform_indices = @transform_1, window_bounds = array<i64: 64, 32>}, {pipeline_mode = #tpu.pipeline_mode<synchronous>, transform_indices = @transform_2, window_bounds = array<i64: 64, 1>}, {pipeline_mode = #tpu.pipeline_mode<synchronous>, transform_indices = @transform_3, window_bounds = array<i64: 288, 64>}, {pipeline_mode = #tpu.pipeline_mode<synchronous>, transform_indices = @transform_4, window_bounds = array<i64: 32, 1>}, {pipeline_mode = #tpu.pipeline_mode<synchronous>, transform_indices = @transform_5, window_bounds = array<i64: 1, 288>}, {transform_indices = @transform_6, window_bounds = array<i64: 1, 32, 288>}]} {
    %c0 = arith.constant 0 : index
    %c0_0 = arith.constant 0 : index
    %0 = vector.load %arg2[%c0, %c0_0] : memref<64x32xbf16, #tpu.memory_space<vmem>>, vector<64x32xbf16>
    %c0_1 = arith.constant 0 : index
    %c0_2 = arith.constant 0 : index
    %c0_3 = arith.constant 0 : index
    %1 = vector.load %arg1[%c0_1, %c0_2, %c0_3] : memref<1x32x288xbf16, #tpu.memory_space<vmem>>, vector<1x32x288xbf16>
    %2 = vector.shape_cast %1 : vector<1x32x288xbf16> to vector<32x288xbf16>
    %cst = arith.constant dense<0.000000e+00> : vector<64x288xf32>
    %3 = tpu.matmul %0, %2, %cst {dimension_numbers = #tpu.dot_dimension_numbers<[1], [0], [0], [1], [0, 0, 1, 1], [], []>} : vector<64x32xbf16>, vector<32x288xbf16>, vector<64x288xf32> -> vector<64x288xf32>
    %c0_4 = arith.constant 0 : index
    %c0_5 = arith.constant 0 : index
    %4 = vector.load %arg3[%c0_4, %c0_5] : memref<64x1xf32, #tpu.memory_space<vmem>>, vector<64x1xf32>
    %5 = vector.broadcast %4 : vector<64x1xf32> to vector<64x288xf32>
    %6 = arith.addf %3, %5 : vector<64x288xf32>
    %cst_6 = arith.constant 0.000000e+00 : f32
    %7 = vector.broadcast %cst_6 : f32 to vector<64x288xf32>
    %8 = arith.maximumf %6, %7 : vector<64x288xf32>
    %9 = vector.extract_strided_slice %8 {offsets = [0, 0], sizes = [64, 286], strides = [1, 1]} : vector<64x288xf32> to vector<64x286xf32>
    %10 = vector.extract_strided_slice %8 {offsets = [0, 1], sizes = [64, 286], strides = [1, 1]} : vector<64x288xf32> to vector<64x286xf32>
    %11 = arith.maximumf %9, %10 : vector<64x286xf32>
    %12 = vector.extract_strided_slice %8 {offsets = [0, 2], sizes = [64, 286], strides = [1, 1]} : vector<64x288xf32> to vector<64x286xf32>
    %13 = arith.maximumf %11, %12 : vector<64x286xf32>
    %14 = vector.extract_strided_slice %13 {offsets = [0, 0], sizes = [64, 250], strides = [1, 1]} : vector<64x286xf32> to vector<64x250xf32>
    %15 = vector.extract_strided_slice %13 {offsets = [0, 18], sizes = [64, 250], strides = [1, 1]} : vector<64x286xf32> to vector<64x250xf32>
    %16 = arith.maximumf %14, %15 : vector<64x250xf32>
    %17 = vector.extract_strided_slice %13 {offsets = [0, 36], sizes = [64, 250], strides = [1, 1]} : vector<64x286xf32> to vector<64x250xf32>
    %18 = arith.maximumf %16, %17 : vector<64x250xf32>
    %c0_7 = arith.constant 0 : index
    %c0_8 = arith.constant 0 : index
    %19 = vector.load %arg6[%c0_7, %c0_8] : memref<1x288xf32, #tpu.memory_space<vmem>>, vector<1x250xf32>
    %20 = vector.broadcast %19 : vector<1x250xf32> to vector<64x250xf32>
    %21 = arith.mulf %18, %20 : vector<64x250xf32>
    %22 = arith.truncf %21 : vector<64x250xf32> to vector<64x250xbf16>
    %cst_9 = arith.constant 0.000000e+00 : bf16
    %23 = vector.broadcast %cst_9 : bf16 to vector<64x38xbf16>
    %24 = tpu.concatenate %23, %22, %23 in 1 : vector<64x38xbf16>, vector<64x250xbf16>, vector<64x38xbf16> -> vector<64x326xbf16>
    %cst_10 = arith.constant 0.000000e+00 : f32
    %25 = vector.broadcast %cst_10 : f32 to vector<32x288xf32>
    %c0_11 = arith.constant 0 : index
    %c0_12 = arith.constant 0 : index
    %26 = vector.load %arg4[%c0_11, %c0_12] : memref<288x64xbf16, #tpu.memory_space<vmem>>, vector<32x64xbf16>
    %27 = vector.extract_strided_slice %24 {offsets = [0, 0], sizes = [64, 288], strides = [1, 1]} : vector<64x326xbf16> to vector<64x288xbf16>
    %cst_13 = arith.constant dense<0.000000e+00> : vector<32x288xf32>
    %28 = tpu.matmul %26, %27, %cst_13 {dimension_numbers = #tpu.dot_dimension_numbers<[1], [0], [0], [1], [0, 0, 1, 1], [], []>} : vector<32x64xbf16>, vector<64x288xbf16>, vector<32x288xf32> -> vector<32x288xf32>
    %29 = arith.addf %25, %28 : vector<32x288xf32>
    %c32 = arith.constant 32 : index
    %c0_14 = arith.constant 0 : index
    %30 = vector.load %arg4[%c32, %c0_14] : memref<288x64xbf16, #tpu.memory_space<vmem>>, vector<32x64xbf16>
    %31 = vector.extract_strided_slice %24 {offsets = [0, 1], sizes = [64, 288], strides = [1, 1]} : vector<64x326xbf16> to vector<64x288xbf16>
    %cst_15 = arith.constant dense<0.000000e+00> : vector<32x288xf32>
    %32 = tpu.matmul %30, %31, %cst_15 {dimension_numbers = #tpu.dot_dimension_numbers<[1], [0], [0], [1], [0, 0, 1, 1], [], []>} : vector<32x64xbf16>, vector<64x288xbf16>, vector<32x288xf32> -> vector<32x288xf32>
    %33 = arith.addf %29, %32 : vector<32x288xf32>
    %c64 = arith.constant 64 : index
    %c0_16 = arith.constant 0 : index
    %34 = vector.load %arg4[%c64, %c0_16] : memref<288x64xbf16, #tpu.memory_space<vmem>>, vector<32x64xbf16>
    %35 = vector.extract_strided_slice %24 {offsets = [0, 2], sizes = [64, 288], strides = [1, 1]} : vector<64x326xbf16> to vector<64x288xbf16>
    %cst_17 = arith.constant dense<0.000000e+00> : vector<32x288xf32>
    %36 = tpu.matmul %34, %35, %cst_17 {dimension_numbers = #tpu.dot_dimension_numbers<[1], [0], [0], [1], [0, 0, 1, 1], [], []>} : vector<32x64xbf16>, vector<64x288xbf16>, vector<32x288xf32> -> vector<32x288xf32>
    %37 = arith.addf %33, %36 : vector<32x288xf32>
    %c96 = arith.constant 96 : index
    %c0_18 = arith.constant 0 : index
    %38 = vector.load %arg4[%c96, %c0_18] : memref<288x64xbf16, #tpu.memory_space<vmem>>, vector<32x64xbf16>
    %39 = vector.extract_strided_slice %24 {offsets = [0, 18], sizes = [64, 288], strides = [1, 1]} : vector<64x326xbf16> to vector<64x288xbf16>
    %cst_19 = arith.constant dense<0.000000e+00> : vector<32x288xf32>
    %40 = tpu.matmul %38, %39, %cst_19 {dimension_numbers = #tpu.dot_dimension_numbers<[1], [0], [0], [1], [0, 0, 1, 1], [], []>} : vector<32x64xbf16>, vector<64x288xbf16>, vector<32x288xf32> -> vector<32x288xf32>
    %41 = arith.addf %37, %40 : vector<32x288xf32>
    %c128 = arith.constant 128 : index
    %c0_20 = arith.constant 0 : index
    %42 = vector.load %arg4[%c128, %c0_20] : memref<288x64xbf16, #tpu.memory_space<vmem>>, vector<32x64xbf16>
    %43 = vector.extract_strided_slice %24 {offsets = [0, 19], sizes = [64, 288], strides = [1, 1]} : vector<64x326xbf16> to vector<64x288xbf16>
    %cst_21 = arith.constant dense<0.000000e+00> : vector<32x288xf32>
    %44 = tpu.matmul %42, %43, %cst_21 {dimension_numbers = #tpu.dot_dimension_numbers<[1], [0], [0], [1], [0, 0, 1, 1], [], []>} : vector<32x64xbf16>, vector<64x288xbf16>, vector<32x288xf32> -> vector<32x288xf32>
    %45 = arith.addf %41, %44 : vector<32x288xf32>
    %c160 = arith.constant 160 : index
    %c0_22 = arith.constant 0 : index
    %46 = vector.load %arg4[%c160, %c0_22] : memref<288x64xbf16, #tpu.memory_space<vmem>>, vector<32x64xbf16>
    %47 = vector.extract_strided_slice %24 {offsets = [0, 20], sizes = [64, 288], strides = [1, 1]} : vector<64x326xbf16> to vector<64x288xbf16>
    %cst_23 = arith.constant dense<0.000000e+00> : vector<32x288xf32>
    %48 = tpu.matmul %46, %47, %cst_23 {dimension_numbers = #tpu.dot_dimension_numbers<[1], [0], [0], [1], [0, 0, 1, 1], [], []>} : vector<32x64xbf16>, vector<64x288xbf16>, vector<32x288xf32> -> vector<32x288xf32>
    %49 = arith.addf %45, %48 : vector<32x288xf32>
    %c192 = arith.constant 192 : index
    %c0_24 = arith.constant 0 : index
    %50 = vector.load %arg4[%c192, %c0_24] : memref<288x64xbf16, #tpu.memory_space<vmem>>, vector<32x64xbf16>
    %51 = vector.extract_strided_slice %24 {offsets = [0, 36], sizes = [64, 288], strides = [1, 1]} : vector<64x326xbf16> to vector<64x288xbf16>
    %cst_25 = arith.constant dense<0.000000e+00> : vector<32x288xf32>
    %52 = tpu.matmul %50, %51, %cst_25 {dimension_numbers = #tpu.dot_dimension_numbers<[1], [0], [0], [1], [0, 0, 1, 1], [], []>} : vector<32x64xbf16>, vector<64x288xbf16>, vector<32x288xf32> -> vector<32x288xf32>
    %53 = arith.addf %49, %52 : vector<32x288xf32>
    %c224 = arith.constant 224 : index
    %c0_26 = arith.constant 0 : index
    %54 = vector.load %arg4[%c224, %c0_26] : memref<288x64xbf16, #tpu.memory_space<vmem>>, vector<32x64xbf16>
    %55 = vector.extract_strided_slice %24 {offsets = [0, 37], sizes = [64, 288], strides = [1, 1]} : vector<64x326xbf16> to vector<64x288xbf16>
    %cst_27 = arith.constant dense<0.000000e+00> : vector<32x288xf32>
    %56 = tpu.matmul %54, %55, %cst_27 {dimension_numbers = #tpu.dot_dimension_numbers<[1], [0], [0], [1], [0, 0, 1, 1], [], []>} : vector<32x64xbf16>, vector<64x288xbf16>, vector<32x288xf32> -> vector<32x288xf32>
    %57 = arith.addf %53, %56 : vector<32x288xf32>
    %c256 = arith.constant 256 : index
    %c0_28 = arith.constant 0 : index
    %58 = vector.load %arg4[%c256, %c0_28] : memref<288x64xbf16, #tpu.memory_space<vmem>>, vector<32x64xbf16>
    %59 = vector.extract_strided_slice %24 {offsets = [0, 38], sizes = [64, 288], strides = [1, 1]} : vector<64x326xbf16> to vector<64x288xbf16>
    %cst_29 = arith.constant dense<0.000000e+00> : vector<32x288xf32>
    %60 = tpu.matmul %58, %59, %cst_29 {dimension_numbers = #tpu.dot_dimension_numbers<[1], [0], [0], [1], [0, 0, 1, 1], [], []>} : vector<32x64xbf16>, vector<64x288xbf16>, vector<32x288xf32> -> vector<32x288xf32>
    %61 = arith.addf %57, %60 : vector<32x288xf32>
    %c0_30 = arith.constant 0 : index
    %c0_31 = arith.constant 0 : index
    %62 = vector.load %arg5[%c0_30, %c0_31] : memref<32x1xf32, #tpu.memory_space<vmem>>, vector<32x1xf32>
    %63 = vector.broadcast %62 : vector<32x1xf32> to vector<32x288xf32>
    %64 = arith.addf %61, %63 : vector<32x288xf32>
    %cst_32 = arith.constant 0.000000e+00 : f32
    %65 = vector.broadcast %cst_32 : f32 to vector<32x288xf32>
    %66 = arith.maximumf %64, %65 : vector<32x288xf32>
    %c0_33 = arith.constant 0 : index
    %c0_34 = arith.constant 0 : index
    %c0_35 = arith.constant 0 : index
    %67 = vector.load %arg7[%c0_33, %c0_34, %c0_35] : memref<1x32x288xf32, #tpu.memory_space<vmem>>, vector<1x32x288xf32>
    %68 = vector.shape_cast %67 : vector<1x32x288xf32> to vector<32x288xf32>
    %69 = vector.shape_cast %66 : vector<32x288xf32> to vector<1x32x288xf32>
    tpu.vector_store %arg7[%c0_33, %c0_34, %c0_35], %69 {strides = array<i32>} : memref<1x32x288xf32, #tpu.memory_space<vmem>>, vector<1x32x288xf32>,
    return
  }
  func.func @transform_0(%arg0: i32) -> (i32, i32, i32) {
    %c0_i32 = arith.constant 0 : i32
    %c0_i32_0 = arith.constant 0 : i32
    %c0_i32_1 = arith.constant 0 : i32
    return %arg0, %c0_i32, %c0_i32_0 : i32, i32, i32
  }
  func.func @transform_1(%arg0: i32) -> (i32, i32) {
    %c0_i32 = arith.constant 0 : i32
    %c0_i32_0 = arith.constant 0 : i32
    %c0_i32_1 = arith.constant 0 : i32
    return %c0_i32, %c0_i32_0 : i32, i32
  }
  func.func @transform_2(%arg0: i32) -> (i32, i32) {
    %c0_i32 = arith.constant 0 : i32
    %c0_i32_0 = arith.constant 0 : i32
    %c0_i32_1 = arith.constant 0 : i32
    return %c0_i32, %c0_i32_0 : i32, i32
  }
  func.func @transform_3(%arg0: i32) -> (i32, i32) {
    %c0_i32 = arith.constant 0 : i32
    %c0_i32_0 = arith.constant 0 : i32
    %c0_i32_1 = arith.constant 0 : i32
    return %c0_i32, %c0_i32_0 : i32, i32
  }
  func.func @transform_4(%arg0: i32) -> (i32, i32) {
    %c0_i32 = arith.constant 0 : i32
    %c0_i32_0 = arith.constant 0 : i32
    %c0_i32_1 = arith.constant 0 : i32
    return %c0_i32, %c0_i32_0 : i32, i32
  }
  func.func @transform_5(%arg0: i32) -> (i32, i32) {
    %c0_i32 = arith.constant 0 : i32
    %c0_i32_0 = arith.constant 0 : i32
    %c0_i32_1 = arith.constant 0 : i32
    return %c0_i32, %c0_i32_0 : i32, i32
  }
  func.func @transform_6(%arg0: i32) -> (i32, i32, i32) {
    %c0_i32 = arith.constant 0 : i32
    %c0_i32_0 = arith.constant 0 : i32
    %c0_i32_1 = arith.constant 0 : i32
    return %arg0, %c0_i32, %c0_i32_0 : i32, i32, i32
  }
}

</mosaic_0001>

<llo_original>
// kernel: g_forward.1
$region0: #{g_forward.1}
  #allocation0 [shape = 'u32[]', space=smem, size = 0x4, offset = 0x4, fixed_abs, tag = 'smem constant byte address 0x4 - core index']
  #allocation1 [shape = 'u32[144,128]{1,0:T(1,128)}', space=vmem, size = 0x12000, scoped, tag = 'internal scratch']
  %s0 = inlined_call_operand.vmem [shape: bf16[2,32,288], index: 0, kind: input, shape index: {}]
  %s1 = inlined_call_operand.vmem [shape: bf16[64,32], index: 1, kind: input, shape index: {}]
  %s2 = inlined_call_operand.vmem [shape: f32[64,1], index: 2, kind: input, shape index: {}]
  %s3 = inlined_call_operand.vmem [shape: bf16[288,64], index: 3, kind: input, shape index: {}]
  %s4 = inlined_call_operand.vmem [shape: f32[32,1], index: 4, kind: input, shape index: {}]
  %s5 = inlined_call_operand.vmem [shape: f32[1,288], index: 5, kind: input, shape index: {}]
  %s6 = inlined_call_operand.vmem [shape: f32[2,32,288], index: 6, kind: output, shape index: {}]
  %s7 = sld [smem:[#allocation0]]
  $region57: #{g_forward.1} parent=0
    _
  %s9 = ssub.s32 1, %s7
  %s10 = scalar_select 0, %s9, %s7
  loop: start=0, step=1, limit=4
  $region2: #{g_forward.1} parent=0 // loop_pre_header
    _
  $region3: #{g_forward.1} parent=0 // loop_header
    %s12 = sphi 0, %s16
    %p13 = scmp.ge.s32.totalorder %s12, 4
    %s22 = sphi 0, %s24
    %s25 = sphi 0, %s22
    %s26 = sphi 0, %s25
    %s42 = sphi 0, %s26
    %s46 = sphi 0, %s46
    %s48 = sphi 0, %s46
    %s49 = sphi 0, %s48
    %s63 = sphi 0, %s49
    %s67 = sphi 0, %s67
    %s69 = sphi 0, %s67
    %s70 = sphi 0, %s69
    %s84 = sphi 0, %s70
    %s88 = sphi 0, %s88
    %s90 = sphi 0, %s88
    %s91 = sphi 0, %s90
    %s105 = sphi 0, %s91
    %s109 = sphi 0, %s109
    %s111 = sphi 0, %s109
    %s112 = sphi 0, %s111
    %s126 = sphi 0, %s112
    %s130 = sphi 0, %s130
    %s132 = sphi 0, %s130
    %s133 = sphi 0, %s132
    %s147 = sphi 0, %s133
    %s153 = sphi 0, %s155
    %s156 = sphi 0, %s153
    %s157 = sphi 0, %s156
    %s173 = sphi 0, %s157
  $region4: #{g_forward.1} parent=0 // loop_header_branch
    %15 = sbr.rel (%p13) target = $region8
  $region5: #{g_forward.1} parent=0 // loop_body
    %s17 = ssub.s32 %s12, 1
    %s18 = ssub.s32 %s12, 2
    %s19 = sadd.s32 %s12, 1
    %s20 = ssub.s32 %s12, %s19
    %p21 = scmp.eq.s32.totalorder %s20, 0
    %s23 = sadd.s32 %s22, 1
    %s24 = scalar_select %p21, %s22, %s23
    %p27 = pneg %p21
    %p28 = scmp.eq.s32.totalorder %s12, 1
    %p29 = por %p27, %p28
    %p30 = scmp.ne.s32.totalorder %s22, %s25
    %p31 = scmp.eq.s32.totalorder %s12, 0
    %p32 = por %p30, %p31
    %p33 = scmp.ne.s32.totalorder %s22, %s25
    %p34 = scmp.eq.s32.totalorder %s17, 1
    %p35 = por %p33, %p34
    %p36 = scmp.ne.s32.totalorder %s25, %s26
    %p37 = scmp.eq.s32.totalorder %s17, 0
    %p38 = por %p36, %p37
    %p39 = scmp.ne.s32.totalorder %s25, %s26
    %p40 = scmp.eq.s32.totalorder %s18, 1
    %p41 = por %p39, %p40
    %p43 = scmp.ne.s32.totalorder %s26, %s42
    %p44 = scmp.eq.s32.totalorder %s18, 0
    %p45 = por %p43, %p44
    %s47 = sadd.s32 %s46, 1
    %p50 = scmp.eq.s32.totalorder %s12, 1
    %p51 = scmp.ne.s32.totalorder %s46, %s48
    %p52 = scmp.eq.s32.totalorder %s12, 0
    %p53 = por %p51, %p52
    %p54 = scmp.ne.s32.totalorder %s46, %s48
    %p55 = scmp.eq.s32.totalorder %s17, 1
    %p56 = por %p54, %p55
    %p57 = scmp.ne.s32.totalorder %s48, %s49
    %p58 = scmp.eq.s32.totalorder %s17, 0
    %p59 = por %p57, %p58
    %p60 = scmp.ne.s32.totalorder %s48, %s49
    %p61 = scmp.eq.s32.totalorder %s18, 1
    %p62 = por %p60, %p61
    %p64 = scmp.ne.s32.totalorder %s49, %s63
    %p65 = scmp.eq.s32.totalorder %s18, 0
    %p66 = por %p64, %p65
    %s68 = sadd.s32 %s67, 1
    %p71 = scmp.eq.s32.totalorder %s12, 1
    %p72 = scmp.ne.s32.totalorder %s67, %s69
    %p73 = scmp.eq.s32.totalorder %s12, 0
    %p74 = por %p72, %p73
    %p75 = scmp.ne.s32.totalorder %s67, %s69
    %p76 = scmp.eq.s32.totalorder %s17, 1
    %p77 = por %p75, %p76
    %p78 = scmp.ne.s32.totalorder %s69, %s70
    %p79 = scmp.eq.s32.totalorder %s17, 0
    %p80 = por %p78, %p79
    %p81 = scmp.ne.s32.totalorder %s69, %s70
    %p82 = scmp.eq.s32.totalorder %s18, 1
    %p83 = por %p81, %p82
    %p85 = scmp.ne.s32.totalorder %s70, %s84
    %p86 = scmp.eq.s32.totalorder %s18, 0
    %p87 = por %p85, %p86
    %s89 = sadd.s32 %s88, 1
    %p92 = scmp.eq.s32.totalorder %s12, 1
    %p93 = scmp.ne.s32.totalorder %s88, %s90
    %p94 = scmp.eq.s32.totalorder %s12, 0
    %p95 = por %p93, %p94
    %p96 = scmp.ne.s32.totalorder %s88, %s90
    %p97 = scmp.eq.s32.totalorder %s17, 1
    %p98 = por %p96, %p97
    %p99 = scmp.ne.s32.totalorder %s90, %s91
    %p100 = scmp.eq.s32.totalorder %s17, 0
    %p101 = por %p99, %p100
    %p102 = scmp.ne.s32.totalorder %s90, %s91
    %p103 = scmp.eq.s32.totalorder %s18, 1
    %p104 = por %p102, %p103
    %p106 = scmp.ne.s32.totalorder %s91, %s105
    %p107 = scmp.eq.s32.totalorder %s18, 0
    %p108 = por %p106, %p107
    %s110 = sadd.s32 %s109, 1
    %p113 = scmp.eq.s32.totalorder %s12, 1
    %p114 = scmp.ne.s32.totalorder %s109, %s111
    %p115 = scmp.eq.s32.totalorder %s12, 0
    %p116 = por %p114, %p115
    %p117 = scmp.ne.s32.totalorder %s109, %s111
    %p118 = scmp.eq.s32.totalorder %s17, 1
    %p119 = por %p117, %p118
    %p120 = scmp.ne.s32.totalorder %s111, %s112
    %p121 = scmp.eq.s32.totalorder %s17, 0
    %p122 = por %p120, %p121
    %p123 = scmp.ne.s32.totalorder %s111, %s112
    %p124 = scmp.eq.s32.totalorder %s18, 1
    %p125 = por %p123, %p124
    %p127 = scmp.ne.s32.totalorder %s112, %s126
    %p128 = scmp.eq.s32.totalorder %s18, 0
    %p129 = por %p127, %p128
    %s131 = sadd.s32 %s130, 1
    %p134 = scmp.eq.s32.totalorder %s12, 1
    %p135 = scmp.ne.s32.totalorder %s130, %s132
    %p136 = scmp.eq.s32.totalorder %s12, 0
    %p137 = por %p135, %p136
    %p138 = scmp.ne.s32.totalorder %s130, %s132
    %p139 = scmp.eq.s32.totalorder %s17, 1
    %p140 = por %p138, %p139
    %p141 = scmp.ne.s32.totalorder %s132, %s133
    %p142 = scmp.eq.s32.totalorder %s17, 0
    %p143 = por %p141, %p142
    %p144 = scmp.ne.s32.totalorder %s132, %s133
    %p145 = scmp.eq.s32.totalorder %s18, 1
    %p146 = por %p144, %p145
    %p148 = scmp.ne.s32.totalorder %s133, %s147
    %p149 = scmp.eq.s32.totalorder %s18, 0
    %p150 = por %p148, %p149
    %s151 = ssub.s32 %s12, %s19
    %p152 = scmp.eq.s32.totalorder %s151, 0
    %s154 = sadd.s32 %s153, 1
    %s155 = scalar_select %p152, %s153, %s154
    %p158 = pneg %p152
    %p159 = scmp.eq.s32.totalorder %s12, 1
    %p160 = por %p158, %p159
    %p161 = scmp.ne.s32.totalorder %s153, %s156
    %p162 = scmp.eq.s32.totalorder %s12, 0
    %p163 = por %p161, %p162
    %p164 = scmp.ne.s32.totalorder %s153, %s156
    %p165 = scmp.eq.s32.totalorder %s17, 1
    %p166 = por %p164, %p165
    %p167 = scmp.ne.s32.totalorder %s156, %s157
    %p168 = scmp.eq.s32.totalorder %s17, 0
    %p169 = por %p167, %p168
    %p170 = scmp.ne.s32.totalorder %s156, %s157
    %p171 = scmp.eq.s32.totalorder %s18, 1
    %p172 = por %p170, %p171
    %p174 = scmp.ne.s32.totalorder %s157, %s173
    %p175 = scmp.eq.s32.totalorder %s18, 0
    %p176 = por %p174, %p175
    %p177 = scmp.le.s32.totalorder 1, %s12
    %p178 = scmp.lt.s32.totalorder %s12, 3
    %p179 = pnand %p177, %p178
    %p180 = pneg %p179
    // Predicated region
    $region9: #{g_forward.1} parent=5 // pred_check
      _
    $region10: #{g_forward.1} parent=5 // pred_check_branch
      %182 = sbr.rel (%p179) target = $region12
    $region11: #{g_forward.1} parent=5 // pred_region
      %s183 = ssub.s32 %s12, 1
      // Predicated region
      $region13: #{g_forward.1} parent=11 // pred_check
        %p184 = pneg %p59
      $region14: #{g_forward.1} parent=11 // pred_check_branch
        %186 = sbr.rel (%p184) target = $region16
      $region15: #{g_forward.1} parent=11 // pred_region
        _
      $region16: #{g_forward.1} parent=11 // pred_fallthru
        _
      // Predicated region
      $region17: #{g_forward.1} parent=11 // pred_check
        %p187 = pneg %p80
      $region18: #{g_forward.1} parent=11 // pred_check_branch
        %189 = sbr.rel (%p187) target = $region20
      $region19: #{g_forward.1} parent=11 // pred_region
        _
      $region20: #{g_forward.1} parent=11 // pred_fallthru
        _
      // Predicated region
      $region21: #{g_forward.1} parent=11 // pred_check
        %p190 = pneg %p101
      $region22: #{g_forward.1} parent=11 // pred_check_branch
        %192 = sbr.rel (%p190) target = $region24
      $region23: #{g_forward.1} parent=11 // pred_region
        _
      $region24: #{g_forward.1} parent=11 // pred_fallthru
        _
      // Predicated region
      $region25: #{g_forward.1} parent=11 // pred_check
        %p193 = pneg %p122
      $region26: #{g_forward.1} parent=11 // pred_check_branch
        %195 = sbr.rel (%p193) target = $region28
      $region27: #{g_forward.1} parent=11 // pred_region
        _
      $region28: #{g_forward.1} parent=11 // pred_fallthru
        _
      // Predicated region
      $region29: #{g_forward.1} parent=11 // pred_check
        %p196 = pneg %p143
      $region30: #{g_forward.1} parent=11 // pred_check_branch
        %198 = sbr.rel (%p196) target = $region32
      $region31: #{g_forward.1} parent=11 // pred_region
        _
      $region32: #{g_forward.1} parent=11 // pred_fallthru
        _
    $region12: #{g_forward.1} parent=5 // pred_fallthru
      _
    %p199 = scmp.lt.s32.totalorder %s12, 2
    // Predicated region
    $region33: #{g_forward.1} parent=5 // pred_check
      %p200 = pneg %p199
    $region34: #{g_forward.1} parent=5 // pred_check_branch
      %202 = sbr.rel (%p200) target = $region36
    $region35: #{g_forward.1} parent=5 // pred_region
      // Predicated region
      $region37: #{g_forward.1} parent=35 // pred_check
        %p203 = pneg %p32
      $region38: #{g_forward.1} parent=35 // pred_check_branch
        %205 = sbr.rel (%p203) target = $region40
      $region39: #{g_forward.1} parent=35 // pred_region
        %p206 = scmp.lt.s32.totalorder %s12, 1
        %s207 = scalar_select %p206, %s12, 1
        %s208 = smul.addr %s207, 12
        %s209 = smul.addr %s208, 4
        %s210 = scalar_lea.vmem %s0, %s209
      $region40: #{g_forward.1} parent=35 // pred_fallthru
        _
    $region36: #{g_forward.1} parent=5 // pred_fallthru
      _
    %p211 = scmp.le.s32.totalorder 1, %s12
    %p212 = scmp.lt.s32.totalorder %s12, 3
    %p213 = pnand %p211, %p212
    %p214 = pneg %p213
    // Predicated region
    $region41: #{g_forward.1} parent=5 // pred_check
      _
    $region42: #{g_forward.1} parent=5 // pred_check_branch
      %216 = sbr.rel (%p213) target = $region44
    $region43: #{g_forward.1} parent=5 // pred_region
      %s217 = ssub.s32 %s12, 1
      %p218 = scmp.lt.s32.totalorder %s17, 1
      %s219 = scalar_select %p218, %s17, 1
      %s220 = smul.addr %s219, 12
      %s221 = smul.addr %s220, 4
      %s222 = scalar_lea.vmem %s0, %s221
      %p223 = pneg %p38
      %p224 = pneg %p35
      %p225 = pneg %p59
      %p226 = pneg %p56
      %p227 = pneg %p80
      %p228 = pneg %p77
      %p229 = pneg %p101
      %p230 = pneg %p98
      %p231 = pneg %p122
      %p232 = pneg %p119
      %p233 = pneg %p143
      %p234 = pneg %p140
      %p235 = pneg %p169
      %p236 = pneg %p166
      %p237 = scmp.lt.s32.totalorder %s17, 1
      %s238 = scalar_select %p237, %s17, 1
      %s239 = smul.addr %s238, 12
      %s240 = smul.addr %s239, 8
      %s241 = scalar_lea.vmem %s6, %s240
      %p242 = scmp.lt.s32.totalorder %s17, 1
      %s243 = scalar_select %p242, %s17, 1
      %s244 = smul.addr %s243, 12
      %s245 = smul.addr %s244, 4
      %s246 = scalar_lea.vmem %s0, %s245
      %p247 = scmp.lt.s32.totalorder %s17, 1
      %s248 = scalar_select %p247, %s17, 1
      %s249 = smul.addr %s248, 12
      %s250 = smul.addr %s249, 8
      %s251 = scalar_lea.vmem %s6, %s250
      %v253 = vld [vmem:[%s1] sm:$0xf]
      %v254 = vld [vmem:[%s1 + $0x4] sm:$0xf]
      %v255 = vld [vmem:[%s1 + $0x8] sm:$0xf]
      %v256 = vld [vmem:[%s1 + $0xc] sm:$0xf]
      %v257 = vld [vmem:[%s1 + $0x10] sm:$0xf]
      %v258 = vld [vmem:[%s1 + $0x14] sm:$0xf]
      %v259 = vld [vmem:[%s1 + $0x18] sm:$0xf]
      %v260 = vld [vmem:[%s1 + $0x1c] sm:$0xf]
      %v261 = vld [vmem:[%s246] sm:$0xff]
      %v262 = vld [vmem:[%s246 + $0x8] sm:$0xf]
      %v263 = vld [vmem:[%s246 + $0xc] sm:$0xff]
      %v264 = vld [vmem:[%s246 + $0x14] sm:$0xf]
      %v265 = vld [vmem:[%s246 + $0x18] sm:$0xff]
      %v266 = vld [vmem:[%s246 + $0x20] sm:$0xf]
      %v267 = vld [vmem:[%s246 + $0x24] sm:$0xff]
      %v268 = vld [vmem:[%s246 + $0x2c] sm:$0xf]
      %v269 = vld [vmem:[%s2] sm:$0xff]
      %v270 = vld [vmem:[%s2 + $0x8] sm:$0xff]
      %v271 = vld [vmem:[%s2 + $0x10] sm:$0xff]
      %v272 = vld [vmem:[%s2 + $0x18] sm:$0xff]
      %v273 = vld [vmem:[%s2 + $0x20] sm:$0xff]
      %v274 = vld [vmem:[%s2 + $0x28] sm:$0xff]
      %v275 = vld [vmem:[%s2 + $0x30] sm:$0xff]
      %v276 = vld [vmem:[%s2 + $0x38] sm:$0xff]
      %278 = vset.pattern.permute.xlu0 0
      %279 = vperm.xlu0 %278, %v269
      %v280 = vpop.permute.xlu0 %279
      %283 = vset.pattern.permute.xlu0 0
      %284 = vperm.xlu0 %283, %v270
      %v285 = vpop.permute.xlu0 %284
      %288 = vset.pattern.permute.xlu0 0
      %289 = vperm.xlu0 %288, %v271
      %v290 = vpop.permute.xlu0 %289
      %293 = vset.pattern.permute.xlu0 0
      %294 = vperm.xlu0 %293, %v272
      %v295 = vpop.permute.xlu0 %294
      %298 = vset.pattern.permute.xlu0 0
      %299 = vperm.xlu0 %298, %v273
      %v300 = vpop.permute.xlu0 %299
      %303 = vset.pattern.permute.xlu0 0
      %304 = vperm.xlu0 %303, %v274
      %v305 = vpop.permute.xlu0 %304
      %308 = vset.pattern.permute.xlu0 0
      %309 = vperm.xlu0 %308, %v275
      %v310 = vpop.permute.xlu0 %309
      %313 = vset.pattern.permute.xlu0 0
      %314 = vperm.xlu0 %313, %v276
      %v315 = vpop.permute.xlu0 %314
      %v325 = vunpack.c.l.b16 %v253
      %v326 = vunpack.c.l.b16 %v254
      %v327 = vunpack.c.l.b16 %v255
      %v328 = vunpack.c.l.b16 %v256
      %v329 = vunpack.c.l.b16 %v257
      %v330 = vunpack.c.l.b16 %v258
      %v331 = vunpack.c.l.b16 %v259
      %v332 = vunpack.c.l.b16 %v260
      %v333 = vpack.c.b16 %v326, %v325
      %v334 = vpack.c.b16 %v328, %v327
      %v335 = vpack.c.b16 %v330, %v329
      %v336 = vpack.c.b16 %v332, %v331
      %v345 = vunpack.c.l.b16 %v261
      %v346 = vunpack.c.h.b16 %v261
      %v347 = vunpack.c.l.b16 %v262
      %v348 = vunpack.c.l.b16 %v263
      %v349 = vunpack.c.h.b16 %v263
      %v350 = vunpack.c.l.b16 %v264
      %v351 = vunpack.c.l.b16 %v265
      %v352 = vunpack.c.h.b16 %v265
      %v353 = vunpack.c.l.b16 %v266
      %v354 = vunpack.c.l.b16 %v267
      %v355 = vunpack.c.h.b16 %v267
      %v356 = vunpack.c.l.b16 %v268
      %v357 = vpack.c.b16 %v348, %v345
      %v358 = vpack.c.b16 %v349, %v346
      %v359 = vpack.c.b16 %v350, %v347
      %v360 = vpack.c.b16 %v354, %v351
      %v361 = vpack.c.b16 %v355, %v352
      %v362 = vpack.c.b16 %v356, %v353
      %vm369 = vcmask 261120
      %v371 = vsel %vm369, %v333, 0
      %v374 = vsel %vm369, %v334, 0
      %v377 = vsel %vm369, %v335, 0
      %v380 = vsel %vm369, %v336, 0
      %382 = vmatprep.subr.bf16.mxu0 %v358
      %383 = vmatpush1.bf16.msra.mxu0 %v357
      %384 = vmatprep.subr.bf16.mxu0 %v361
      %385 = vmatpush1.bf16.msra.mxu0 %v360
      %386 = vmatprep.subr.bf16.mxu0 0
      %387 = vmatpush1.bf16.msra.mxu0 0
      %388 = vmatprep.subr.bf16.mxu0 0
      %389 = vmatpush1.bf16.msra.mxu0 0
      %390 = vmatprep.subr.bf16.mxu0 0
      %391 = vmatpush1.bf16.msra.mxu0 0
      %392 = vmatprep.subr.bf16.mxu0 0
      %393 = vmatpush1.bf16.msra.mxu0 0
      %394 = vmatprep.subr.bf16.mxu0 0
      %395 = vmatpush1.bf16.msra.mxu0 0
      %396 = vmatprep.subr.bf16.mxu0 0
      %397 = vmatpush1.bf16.msra.mxu0 0
      %398 = vmatprep.subr.bf16.mxu0 0
      %399 = vmatpush1.bf16.msra.mxu0 0
      %400 = vmatprep.subr.bf16.mxu0 0
      %401 = vmatpush1.bf16.msra.mxu0 0
      %402 = vmatprep.subr.bf16.mxu0 0
      %403 = vmatpush1.bf16.msra.mxu0 0
      %404 = vmatprep.subr.bf16.mxu0 0
      %405 = vmatpush1.bf16.msra.mxu0 0
      %406 = vmatprep.subr.bf16.mxu0 0
      %407 = vmatpush1.bf16.msra.mxu0 0
      %408 = vmatprep.subr.bf16.mxu0 0
      %409 = vmatpush1.bf16.msra.mxu0 0
      %410 = vmatprep.subr.bf16.mxu0 0
      %411 = vmatpush1.bf16.msra.mxu0 0
      %412 = vmatprep.subr.bf16.mxu0 0
      %413 = vmatpush1.bf16.msra.mxu0 0
      %414 = vmatprep.mubr.bf16.mxu0 0
      %415 = vmatmul.mubr.bf16.gmra.mrb[0].mxu0 %v371
      %v416 = vpop.f32.mrb[0].mxu0
      %v417 = vadd.f32 %v280, %v416
      %v418 = vpop.f32.mrb[0].mxu0
      %v419 = vadd.f32 %v280, %v418
      %v420 = vpop.f32.mrb[0].mxu0
      %v421 = vadd.f32 %v285, %v420
      %v422 = vpop.f32.mrb[0].mxu0
      %v423 = vadd.f32 %v285, %v422
      %424 = vmatprep.mubr.bf16.mxu0 0
      %425 = vmatmul.mubr.bf16.gmra.mrb[0].mxu0 %v374
      %v426 = vpop.f32.mrb[0].mxu0
      %v427 = vadd.f32 %v290, %v426
      %v428 = vpop.f32.mrb[0].mxu0
      %v429 = vadd.f32 %v290, %v428
      %v430 = vpop.f32.mrb[0].mxu0
      %v431 = vadd.f32 %v295, %v430
      %v432 = vpop.f32.mrb[0].mxu0
      %v433 = vadd.f32 %v295, %v432
      %434 = vmatprep.mubr.bf16.mxu0 0
      %435 = vmatmul.mubr.bf16.gmra.mrb[0].mxu0 %v377
      %v436 = vpop.f32.mrb[0].mxu0
      %v437 = vadd.f32 %v300, %v436
      %v438 = vpop.f32.mrb[0].mxu0
      %v439 = vadd.f32 %v300, %v438
      %v440 = vpop.f32.mrb[0].mxu0
      %v441 = vadd.f32 %v305, %v440
      %v442 = vpop.f32.mrb[0].mxu0
      %v443 = vadd.f32 %v305, %v442
      %444 = vmatprep.mubr.bf16.mxu0 0
      %445 = vmatmul.mubr.bf16.gmra.mrb[0].mxu0 %v380
      %v446 = vpop.f32.mrb[0].mxu0
      %v447 = vadd.f32 %v310, %v446
      %v448 = vpop.f32.mrb[0].mxu0
      %v449 = vadd.f32 %v310, %v448
      %v450 = vpop.f32.mrb[0].mxu0
      %v451 = vadd.f32 %v315, %v450
      %v452 = vpop.f32.mrb[0].mxu0
      %v453 = vadd.f32 %v315, %v452
      %454 = vdwg.mxu0
      %455 = vmatprep.subr.bf16.mxu0 0
      %456 = vmatpush1.bf16.msra.mxu0 %v359
      %457 = vmatprep.subr.bf16.mxu0 0
      %458 = vmatpush1.bf16.msra.mxu0 %v362
      %459 = vmatprep.subr.bf16.mxu0 0
      %460 = vmatpush1.bf16.msra.mxu0 0
      %461 = vmatprep.subr.bf16.mxu0 0
      %462 = vmatpush1.bf16.msra.mxu0 0
      %463 = vmatprep.subr.bf16.mxu0 0
      %464 = vmatpush1.bf16.msra.mxu0 0
      %465 = vmatprep.subr.bf16.mxu0 0
      %466 = vmatpush1.bf16.msra.mxu0 0
      %467 = vmatprep.subr.bf16.mxu0 0
      %468 = vmatpush1.bf16.msra.mxu0 0
      %469 = vmatprep.subr.bf16.mxu0 0
      %470 = vmatpush1.bf16.msra.mxu0 0
      %471 = vmatprep.subr.bf16.mxu0 0
      %472 = vmatpush1.bf16.msra.mxu0 0
      %473 = vmatprep.subr.bf16.mxu0 0
      %474 = vmatpush1.bf16.msra.mxu0 0
      %475 = vmatprep.subr.bf16.mxu0 0
      %476 = vmatpush1.bf16.msra.mxu0 0
      %477 = vmatprep.subr.bf16.mxu0 0
      %478 = vmatpush1.bf16.msra.mxu0 0
      %479 = vmatprep.subr.bf16.mxu0 0
      %480 = vmatpush1.bf16.msra.mxu0 0
      %481 = vmatprep.subr.bf16.mxu0 0
      %482 = vmatpush1.bf16.msra.mxu0 0
      %483 = vmatprep.subr.bf16.mxu0 0
      %484 = vmatpush1.bf16.msra.mxu0 0
      %485 = vmatprep.subr.bf16.mxu0 0
      %486 = vmatpush1.bf16.msra.mxu0 0
      %487 = vmatprep.mubr.bf16.mxu0 0
      %488 = vmatmul.mubr.bf16.gmra.mrb[0].mxu0 %v371
      %v489 = vpop.f32.mrb[0].mxu0
      %v490 = vadd.f32 %v280, %v489
      %v491 = vpop.f32.mrb[0].mxu0
      %v492 = vpop.f32.mrb[0].mxu0
      %v493 = vadd.f32 %v285, %v492
      %v494 = vpop.f32.mrb[0].mxu0
      %495 = vmatprep.mubr.bf16.mxu0 0
      %496 = vmatmul.mubr.bf16.gmra.mrb[0].mxu0 %v374
      %v497 = vpop.f32.mrb[0].mxu0
      %v498 = vadd.f32 %v290, %v497
      %v499 = vpop.f32.mrb[0].mxu0
      %v500 = vpop.f32.mrb[0].mxu0
      %v501 = vadd.f32 %v295, %v500
      %v502 = vpop.f32.mrb[0].mxu0
      %503 = vmatprep.mubr.bf16.mxu0 0
      %504 = vmatmul.mubr.bf16.gmra.mrb[0].mxu0 %v377
      %v505 = vpop.f32.mrb[0].mxu0
      %v506 = vadd.f32 %v300, %v505
      %v507 = vpop.f32.mrb[0].mxu0
      %v508 = vpop.f32.mrb[0].mxu0
      %v509 = vadd.f32 %v305, %v508
      %v510 = vpop.f32.mrb[0].mxu0
      %511 = vmatprep.mubr.bf16.mxu0 0
      %512 = vmatmul.mubr.bf16.gmra.mrb[0].mxu0 %v380
      %v513 = vpop.f32.mrb[0].mxu0
      %v514 = vadd.f32 %v310, %v513
      %v515 = vpop.f32.mrb[0].mxu0
      %v516 = vpop.f32.mrb[0].mxu0
      %v517 = vadd.f32 %v315, %v516
      %v518 = vpop.f32.mrb[0].mxu0
      %519 = vdwg.mxu0
      %v520 = vmax.f32 %v417, 0.0
      %v521 = vmax.f32 %v419, 0.0
      %v522 = vmax.f32 %v490, 0.0
      %v523 = vmax.f32 %v421, 0.0
      %v524 = vmax.f32 %v423, 0.0
      %v525 = vmax.f32 %v493, 0.0
      %v526 = vmax.f32 %v427, 0.0
      %v527 = vmax.f32 %v429, 0.0
      %v528 = vmax.f32 %v498, 0.0
      %v529 = vmax.f32 %v431, 0.0
      %v530 = vmax.f32 %v433, 0.0
      %v531 = vmax.f32 %v501, 0.0
      %v532 = vmax.f32 %v437, 0.0
      %v533 = vmax.f32 %v439, 0.0
      %v534 = vmax.f32 %v506, 0.0
      %v535 = vmax.f32 %v441, 0.0
      %v536 = vmax.f32 %v443, 0.0
      %v537 = vmax.f32 %v509, 0.0
      %v538 = vmax.f32 %v447, 0.0
      %v539 = vmax.f32 %v449, 0.0
      %v540 = vmax.f32 %v514, 0.0
      %v541 = vmax.f32 %v451, 0.0
      %v542 = vmax.f32 %v453, 0.0
      %v543 = vmax.f32 %v517, 0.0
      %568 = vrot.lane.b32.xlu0 %v520, 127
      %v569 = vpop.permute.xlu0 %568
      %570 = vrot.lane.b32.xlu0 %v521, 127
      %v571 = vpop.permute.xlu0 %570
      %572 = vrot.lane.b32.xlu0 %v522, 127
      %v573 = vpop.permute.xlu0 %572
      %574 = vrot.lane.b32.xlu0 %v523, 127
      %v575 = vpop.permute.xlu0 %574
      %576 = vrot.lane.b32.xlu0 %v524, 127
      %v577 = vpop.permute.xlu0 %576
      %578 = vrot.lane.b32.xlu0 %v525, 127
      %v579 = vpop.permute.xlu0 %578
      %580 = vrot.lane.b32.xlu0 %v526, 127
      %v581 = vpop.permute.xlu0 %580
      %582 = vrot.lane.b32.xlu0 %v527, 127
      %v583 = vpop.permute.xlu0 %582
      %584 = vrot.lane.b32.xlu0 %v528, 127
      %v585 = vpop.permute.xlu0 %584
      %586 = vrot.lane.b32.xlu0 %v529, 127
      %v587 = vpop.permute.xlu0 %586
      %588 = vrot.lane.b32.xlu0 %v530, 127
      %v589 = vpop.permute.xlu0 %588
      %590 = vrot.lane.b32.xlu0 %v531, 127
      %v591 = vpop.permute.xlu0 %590
      %592 = vrot.lane.b32.xlu0 %v532, 127
      %v593 = vpop.permute.xlu0 %592
      %594 = vrot.lane.b32.xlu0 %v533, 127
      %v595 = vpop.permute.xlu0 %594
      %596 = vrot.lane.b32.xlu0 %v534, 127
      %v597 = vpop.permute.xlu0 %596
      %598 = vrot.lane.b32.xlu0 %v535, 127
      %v599 = vpop.permute.xlu0 %598
      %600 = vrot.lane.b32.xlu0 %v536, 127
      %v601 = vpop.permute.xlu0 %600
      %602 = vrot.lane.b32.xlu0 %v537, 127
      %v603 = vpop.permute.xlu0 %602
      %604 = vrot.lane.b32.xlu0 %v538, 127
      %v605 = vpop.permute.xlu0 %604
      %606 = vrot.lane.b32.xlu0 %v539, 127
      %v607 = vpop.permute.xlu0 %606
      %608 = vrot.lane.b32.xlu0 %v540, 127
      %v609 = vpop.permute.xlu0 %608
      %610 = vrot.lane.b32.xlu0 %v541, 127
      %v611 = vpop.permute.xlu0 %610
      %612 = vrot.lane.b32.xlu0 %v542, 127
      %v613 = vpop.permute.xlu0 %612
      %614 = vrot.lane.b32.xlu0 %v543, 127
      %v615 = vpop.permute.xlu0 %614
      %vm616 = vcmask 1039360
      %v617 = vsel %vm616, %v569, %v571
      %v618 = vsel %vm616, %v571, %v573
      %v619 = vsel %vm616, %v575, %v577
      %v620 = vsel %vm616, %v577, %v579
      %v621 = vsel %vm616, %v581, %v583
      %v622 = vsel %vm616, %v583, %v585
      %v623 = vsel %vm616, %v587, %v589
      %v624 = vsel %vm616, %v589, %v591
      %v625 = vsel %vm616, %v593, %v595
      %v626 = vsel %vm616, %v595, %v597
      %v627 = vsel %vm616, %v599, %v601
      %v628 = vsel %vm616, %v601, %v603
      %v629 = vsel %vm616, %v605, %v607
      %v630 = vsel %vm616, %v607, %v609
      %v631 = vsel %vm616, %v611, %v613
      %v632 = vsel %vm616, %v613, %v615
      %v657 = vmax.f32 %v520, %v617
      %v658 = vmax.f32 %v521, %v618
      %v659 = vmax.f32 %v522, %v573
      %v660 = vmax.f32 %v523, %v619
      %v661 = vmax.f32 %v524, %v620
      %v662 = vmax.f32 %v525, %v579
      %v663 = vmax.f32 %v526, %v621
      %v664 = vmax.f32 %v527, %v622
      %v665 = vmax.f32 %v528, %v585
      %v666 = vmax.f32 %v529, %v623
      %v667 = vmax.f32 %v530, %v624
      %v668 = vmax.f32 %v531, %v591
      %v669 = vmax.f32 %v532, %v625
      %v670 = vmax.f32 %v533, %v626
      %v671 = vmax.f32 %v534, %v597
      %v672 = vmax.f32 %v535, %v627
      %v673 = vmax.f32 %v536, %v628
      %v674 = vmax.f32 %v537, %v603
      %v675 = vmax.f32 %v538, %v629
      %v676 = vmax.f32 %v539, %v630
      %v677 = vmax.f32 %v540, %v609
      %v678 = vmax.f32 %v541, %v631
      %v679 = vmax.f32 %v542, %v632
      %v680 = vmax.f32 %v543, %v615
      %681 = vrot.lane.b32.xlu0 %v520, 126
      %v682 = vpop.permute.xlu0 %681
      %683 = vrot.lane.b32.xlu0 %v521, 126
      %v684 = vpop.permute.xlu0 %683
      %685 = vrot.lane.b32.xlu0 %v522, 126
      %v686 = vpop.permute.xlu0 %685
      %687 = vrot.lane.b32.xlu0 %v523, 126
      %v688 = vpop.permute.xlu0 %687
      %689 = vrot.lane.b32.xlu0 %v524, 126
      %v690 = vpop.permute.xlu0 %689
      %691 = vrot.lane.b32.xlu0 %v525, 126
      %v692 = vpop.permute.xlu0 %691
      %693 = vrot.lane.b32.xlu0 %v526, 126
      %v694 = vpop.permute.xlu0 %693
      %695 = vrot.lane.b32.xlu0 %v527, 126
      %v696 = vpop.permute.xlu0 %695
      %697 = vrot.lane.b32.xlu0 %v528, 126
      %v698 = vpop.permute.xlu0 %697
      %699 = vrot.lane.b32.xlu0 %v529, 126
      %v700 = vpop.permute.xlu0 %699
      %701 = vrot.lane.b32.xlu0 %v530, 126
      %v702 = vpop.permute.xlu0 %701
      %703 = vrot.lane.b32.xlu0 %v531, 126
      %v704 = vpop.permute.xlu0 %703
      %705 = vrot.lane.b32.xlu0 %v532, 126
      %v706 = vpop.permute.xlu0 %705
      %707 = vrot.lane.b32.xlu0 %v533, 126
      %v708 = vpop.permute.xlu0 %707
      %709 = vrot.lane.b32.xlu0 %v534, 126
      %v710 = vpop.permute.xlu0 %709
      %711 = vrot.lane.b32.xlu0 %v535, 126
      %v712 = vpop.permute.xlu0 %711
      %713 = vrot.lane.b32.xlu0 %v536, 126
      %v714 = vpop.permute.xlu0 %713
      %715 = vrot.lane.b32.xlu0 %v537, 126
      %v716 = vpop.permute.xlu0 %715
      %717 = vrot.lane.b32.xlu0 %v538, 126
      %v718 = vpop.permute.xlu0 %717
      %719 = vrot.lane.b32.xlu0 %v539, 126
      %v720 = vpop.permute.xlu0 %719
      %721 = vrot.lane.b32.xlu0 %v540, 126
      %v722 = vpop.permute.xlu0 %721
      %723 = vrot.lane.b32.xlu0 %v541, 126
      %v724 = vpop.permute.xlu0 %723
      %725 = vrot.lane.b32.xlu0 %v542, 126
      %v726 = vpop.permute.xlu0 %725
      %727 = vrot.lane.b32.xlu0 %v543, 126
      %v728 = vpop.permute.xlu0 %727
      %vm729 = vcmask 1031168
      %v730 = vsel %vm729, %v682, %v684
      %v731 = vsel %vm729, %v684, %v686
      %v732 = vsel %vm729, %v688, %v690
      %v733 = vsel %vm729, %v690, %v692
      %v734 = vsel %vm729, %v694, %v696
      %v735 = vsel %vm729, %v696, %v698
      %v736 = vsel %vm729, %v700, %v702
      %v737 = vsel %vm729, %v702, %v704
      %v738 = vsel %vm729, %v706, %v708
      %v739 = vsel %vm729, %v708, %v710
      %v740 = vsel %vm729, %v712, %v714
      %v741 = vsel %vm729, %v714, %v716
      %v742 = vsel %vm729, %v718, %v720
      %v743 = vsel %vm729, %v720, %v722
      %v744 = vsel %vm729, %v724, %v726
      %v745 = vsel %vm729, %v726, %v728
      %v770 = vmax.f32 %v657, %v730
      %v771 = vmax.f32 %v658, %v731
      %v772 = vmax.f32 %v659, %v686
      %v773 = vmax.f32 %v660, %v732
      %v774 = vmax.f32 %v661, %v733
      %v775 = vmax.f32 %v662, %v692
      %v776 = vmax.f32 %v663, %v734
      %v777 = vmax.f32 %v664, %v735
      %v778 = vmax.f32 %v665, %v698
      %v779 = vmax.f32 %v666, %v736
      %v780 = vmax.f32 %v667, %v737
      %v781 = vmax.f32 %v668, %v704
      %v782 = vmax.f32 %v669, %v738
      %v783 = vmax.f32 %v670, %v739
      %v784 = vmax.f32 %v671, %v710
      %v785 = vmax.f32 %v672, %v740
      %v786 = vmax.f32 %v673, %v741
      %v787 = vmax.f32 %v674, %v716
      %v788 = vmax.f32 %v675, %v742
      %v789 = vmax.f32 %v676, %v743
      %v790 = vmax.f32 %v677, %v722
      %v791 = vmax.f32 %v678, %v744
      %v792 = vmax.f32 %v679, %v745
      %v793 = vmax.f32 %v680, %v728
      %818 = vrot.lane.b32.xlu0 %v770, 110
      %v819 = vpop.permute.xlu0 %818
      %820 = vrot.lane.b32.xlu0 %v771, 110
      %v821 = vpop.permute.xlu0 %820
      %822 = vrot.lane.b32.xlu0 %v772, 110
      %v823 = vpop.permute.xlu0 %822
      %824 = vrot.lane.b32.xlu0 %v773, 110
      %v825 = vpop.permute.xlu0 %824
      %826 = vrot.lane.b32.xlu0 %v774, 110
      %v827 = vpop.permute.xlu0 %826
      %828 = vrot.lane.b32.xlu0 %v775, 110
      %v829 = vpop.permute.xlu0 %828
      %830 = vrot.lane.b32.xlu0 %v776, 110
      %v831 = vpop.permute.xlu0 %830
      %832 = vrot.lane.b32.xlu0 %v777, 110
      %v833 = vpop.permute.xlu0 %832
      %834 = vrot.lane.b32.xlu0 %v778, 110
      %v835 = vpop.permute.xlu0 %834
      %836 = vrot.lane.b32.xlu0 %v779, 110
      %v837 = vpop.permute.xlu0 %836
      %838 = vrot.lane.b32.xlu0 %v780, 110
      %v839 = vpop.permute.xlu0 %838
      %840 = vrot.lane.b32.xlu0 %v781, 110
      %v841 = vpop.permute.xlu0 %840
      %842 = vrot.lane.b32.xlu0 %v782, 110
      %v843 = vpop.permute.xlu0 %842
      %844 = vrot.lane.b32.xlu0 %v783, 110
      %v845 = vpop.permute.xlu0 %844
      %846 = vrot.lane.b32.xlu0 %v784, 110
      %v847 = vpop.permute.xlu0 %846
      %848 = vrot.lane.b32.xlu0 %v785, 110
      %v849 = vpop.permute.xlu0 %848
      %850 = vrot.lane.b32.xlu0 %v786, 110
      %v851 = vpop.permute.xlu0 %850
      %852 = vrot.lane.b32.xlu0 %v787, 110
      %v853 = vpop.permute.xlu0 %852
      %854 = vrot.lane.b32.xlu0 %v788, 110
      %v855 = vpop.permute.xlu0 %854
      %856 = vrot.lane.b32.xlu0 %v789, 110
      %v857 = vpop.permute.xlu0 %856
      %858 = vrot.lane.b32.xlu0 %v790, 110
      %v859 = vpop.permute.xlu0 %858
      %860 = vrot.lane.b32.xlu0 %v791, 110
      %v861 = vpop.permute.xlu0 %860
      %862 = vrot.lane.b32.xlu0 %v792, 110
      %v863 = vpop.permute.xlu0 %862
      %864 = vrot.lane.b32.xlu0 %v793, 110
      %v865 = vpop.permute.xlu0 %864
      %vm866 = vcmask 900096
      %v867 = vsel %vm866, %v819, %v821
      %v868 = vsel %vm866, %v821, %v823
      %v869 = vsel %vm866, %v825, %v827
      %v870 = vsel %vm866, %v827, %v829
      %v871 = vsel %vm866, %v831, %v833
      %v872 = vsel %vm866, %v833, %v835
      %v873 = vsel %vm866, %v837, %v839
      %v874 = vsel %vm866, %v839, %v841
      %v875 = vsel %vm866, %v843, %v845
      %v876 = vsel %vm866, %v845, %v847
      %v877 = vsel %vm866, %v849, %v851
      %v878 = vsel %vm866, %v851, %v853
      %v879 = vsel %vm866, %v855, %v857
      %v880 = vsel %vm866, %v857, %v859
      %v881 = vsel %vm866, %v861, %v863
      %v882 = vsel %vm866, %v863, %v865
      %v899 = vmax.f32 %v770, %v867
      %v900 = vmax.f32 %v771, %v868
      %v901 = vmax.f32 %v773, %v869
      %v902 = vmax.f32 %v774, %v870
      %v903 = vmax.f32 %v776, %v871
      %v904 = vmax.f32 %v777, %v872
      %v905 = vmax.f32 %v779, %v873
      %v906 = vmax.f32 %v780, %v874
      %v907 = vmax.f32 %v782, %v875
      %v908 = vmax.f32 %v783, %v876
      %v909 = vmax.f32 %v785, %v877
      %v910 = vmax.f32 %v786, %v878
      %v911 = vmax.f32 %v788, %v879
      %v912 = vmax.f32 %v789, %v880
      %v913 = vmax.f32 %v791, %v881
      %v914 = vmax.f32 %v792, %v882
      %915 = vrot.lane.b32.xlu0 %v770, 92
      %v916 = vpop.permute.xlu0 %915
      %917 = vrot.lane.b32.xlu0 %v771, 92
      %v918 = vpop.permute.xlu0 %917
      %919 = vrot.lane.b32.xlu0 %v772, 92
      %v920 = vpop.permute.xlu0 %919
      %921 = vrot.lane.b32.xlu0 %v773, 92
      %v922 = vpop.permute.xlu0 %921
      %923 = vrot.lane.b32.xlu0 %v774, 92
      %v924 = vpop.permute.xlu0 %923
      %925 = vrot.lane.b32.xlu0 %v775, 92
      %v926 = vpop.permute.xlu0 %925
      %927 = vrot.lane.b32.xlu0 %v776, 92
      %v928 = vpop.permute.xlu0 %927
      %929 = vrot.lane.b32.xlu0 %v777, 92
      %v930 = vpop.permute.xlu0 %929
      %931 = vrot.lane.b32.xlu0 %v778, 92
      %v932 = vpop.permute.xlu0 %931
      %933 = vrot.lane.b32.xlu0 %v779, 92
      %v934 = vpop.permute.xlu0 %933
      %935 = vrot.lane.b32.xlu0 %v780, 92
      %v936 = vpop.permute.xlu0 %935
      %937 = vrot.lane.b32.xlu0 %v781, 92
      %v938 = vpop.permute.xlu0 %937
      %939 = vrot.lane.b32.xlu0 %v782, 92
      %v940 = vpop.permute.xlu0 %939
      %941 = vrot.lane.b32.xlu0 %v783, 92
      %v942 = vpop.permute.xlu0 %941
      %943 = vrot.lane.b32.xlu0 %v784, 92
      %v944 = vpop.permute.xlu0 %943
      %945 = vrot.lane.b32.xlu0 %v785, 92
      %v946 = vpop.permute.xlu0 %945
      %947 = vrot.lane.b32.xlu0 %v786, 92
      %v948 = vpop.permute.xlu0 %947
      %949 = vrot.lane.b32.xlu0 %v787, 92
      %v950 = vpop.permute.xlu0 %949
      %951 = vrot.lane.b32.xlu0 %v788, 92
      %v952 = vpop.permute.xlu0 %951
      %953 = vrot.lane.b32.xlu0 %v789, 92
      %v954 = vpop.permute.xlu0 %953
      %955 = vrot.lane.b32.xlu0 %v790, 92
      %v956 = vpop.permute.xlu0 %955
      %957 = vrot.lane.b32.xlu0 %v791, 92
      %v958 = vpop.permute.xlu0 %957
      %959 = vrot.lane.b32.xlu0 %v792, 92
      %v960 = vpop.permute.xlu0 %959
      %961 = vrot.lane.b32.xlu0 %v793, 92
      %v962 = vpop.permute.xlu0 %961
      %vm963 = vcmask 752640
      %v964 = vsel %vm963, %v916, %v918
      %v965 = vsel %vm963, %v918, %v920
      %v966 = vsel %vm963, %v922, %v924
      %v967 = vsel %vm963, %v924, %v926
      %v968 = vsel %vm963, %v928, %v930
      %v969 = vsel %vm963, %v930, %v932
      %v970 = vsel %vm963, %v934, %v936
      %v971 = vsel %vm963, %v936, %v938
      %v972 = vsel %vm963, %v940, %v942
      %v973 = vsel %vm963, %v942, %v944
      %v974 = vsel %vm963, %v946, %v948
      %v975 = vsel %vm963, %v948, %v950
      %v976 = vsel %vm963, %v952, %v954
      %v977 = vsel %vm963, %v954, %v956
      %v978 = vsel %vm963, %v958, %v960
      %v979 = vsel %vm963, %v960, %v962
      %v996 = vmax.f32 %v899, %v964
      %v997 = vmax.f32 %v900, %v965
      %v998 = vmax.f32 %v901, %v966
      %v999 = vmax.f32 %v902, %v967
      %v1000 = vmax.f32 %v903, %v968
      %v1001 = vmax.f32 %v904, %v969
      %v1002 = vmax.f32 %v905, %v970
      %v1003 = vmax.f32 %v906, %v971
      %v1004 = vmax.f32 %v907, %v972
      %v1005 = vmax.f32 %v908, %v973
      %v1006 = vmax.f32 %v909, %v974
      %v1007 = vmax.f32 %v910, %v975
      %v1008 = vmax.f32 %v911, %v976
      %v1009 = vmax.f32 %v912, %v977
      %v1010 = vmax.f32 %v913, %v978
      %v1011 = vmax.f32 %v914, %v979
      %v1012 = vld [vmem:[%s5] sm:$0x3]
      %v1014 = vlaneseq
      %v1015 = vshrl.u32 %v1014, 7
      %v1016 = vsub.s32 0, %v1015
      %v1017 = vrot.slane %v1012, %v1016
      %v1018 = vlaneseq
      %v1019 = vshrl.u32 %v1018, 7
      %v1020 = vsub.s32 1, %v1019
      %v1021 = vrot.slane %v1012, %v1020
      %v1024 = vmul.f32 %v996, %v1017
      %v1025 = vmul.f32 %v997, %v1021
      %v1026 = vmul.f32 %v998, %v1017
      %v1027 = vmul.f32 %v999, %v1021
      %v1028 = vmul.f32 %v1000, %v1017
      %v1029 = vmul.f32 %v1001, %v1021
      %v1030 = vmul.f32 %v1002, %v1017
      %v1031 = vmul.f32 %v1003, %v1021
      %v1032 = vmul.f32 %v1004, %v1017
      %v1033 = vmul.f32 %v1005, %v1021
      %v1034 = vmul.f32 %v1006, %v1017
      %v1035 = vmul.f32 %v1007, %v1021
      %v1036 = vmul.f32 %v1008, %v1017
      %v1037 = vmul.f32 %v1009, %v1021
      %v1038 = vmul.f32 %v1010, %v1017
      %v1039 = vmul.f32 %v1011, %v1021
      %v1040 = vpack.c.bf16 %v1026, %v1024
      %v1041 = vpack.c.bf16 %v1027, %v1025
      %v1042 = vpack.c.bf16 %v1030, %v1028
      %v1043 = vpack.c.bf16 %v1031, %v1029
      %v1044 = vpack.c.bf16 %v1034, %v1032
      %v1045 = vpack.c.bf16 %v1035, %v1033
      %v1046 = vpack.c.bf16 %v1038, %v1036
      %v1047 = vpack.c.bf16 %v1039, %v1037
      %1056 = vrot.lane.b32.xlu0 %v1040, 38
      %v1057 = vpop.permute.xlu0 %1056
      %1058 = vrot.lane.b32.xlu0 %v1041, 38
      %v1059 = vpop.permute.xlu0 %1058
      %1060 = vrot.lane.b32.xlu0 %v1042, 38
      %v1061 = vpop.permute.xlu0 %1060
      %1062 = vrot.lane.b32.xlu0 %v1043, 38
      %v1063 = vpop.permute.xlu0 %1062
      %1064 = vrot.lane.b32.xlu0 %v1044, 38
      %v1065 = vpop.permute.xlu0 %1064
      %1066 = vrot.lane.b32.xlu0 %v1045, 38
      %v1067 = vpop.permute.xlu0 %1066
      %1068 = vrot.lane.b32.xlu0 %v1046, 38
      %v1069 = vpop.permute.xlu0 %1068
      %1070 = vrot.lane.b32.xlu0 %v1047, 38
      %v1071 = vpop.permute.xlu0 %1070
      %vm1072 = vcmask 310272
      %v1073 = vsel %vm1072, %v1057, %v1059
      %v1074 = vsel %vm1072, %v1061, %v1063
      %v1075 = vsel %vm1072, %v1065, %v1067
      %v1076 = vsel %vm1072, %v1069, %v1071
      %vm1081 = vcmask 310272
      %v1084 = vsel %vm1081, 0, %v1057
      %v1087 = vsel %vm1081, 0, %v1061
      %v1090 = vsel %vm1081, 0, %v1065
      %v1093 = vsel %vm1081, 0, %v1069
      %v1096 = vsel %vm369, %v1059, 0
      %v1099 = vsel %vm369, %v1063, 0
      %v1102 = vsel %vm369, %v1067, 0
      %v1105 = vsel %vm369, %v1071, 0
      %v1107 = vld [vmem:[%s3] sm:$0xf]
      %v1108 = vld [vmem:[%s3 + $0x4] sm:$0xf]
      %v1109 = vld [vmem:[%s3 + $0x8] sm:$0xf]
      %v1110 = vld [vmem:[%s3 + $0xc] sm:$0xf]
      %v1111 = vld [vmem:[%s3 + $0x10] sm:$0xf]
      %v1112 = vld [vmem:[%s3 + $0x14] sm:$0xf]
      %v1113 = vld [vmem:[%s3 + $0x18] sm:$0xf]
      %v1114 = vld [vmem:[%s3 + $0x1c] sm:$0xf]
      %v1119 = vunpack.c.l.b16 %v1111
      %v1120 = vunpack.c.l.b16 %v1112
      %v1121 = vunpack.c.l.b16 %v1113
      %v1122 = vunpack.c.l.b16 %v1114
      %v1123 = vpack.c.b16 %v1120, %v1119
      %v1124 = vpack.c.b16 %v1122, %v1121
      %1133 = vrot.lane.b32.xlu0 %v1084, 127
      %v1134 = vpop.permute.xlu0 %1133
      %1135 = vrot.lane.b32.xlu0 %v1073, 127
      %v1136 = vpop.permute.xlu0 %1135
      %1137 = vrot.lane.b32.xlu0 %v1096, 127
      %v1138 = vpop.permute.xlu0 %1137
      %1139 = vrot.lane.b32.xlu0 %v1087, 127
      %v1140 = vpop.permute.xlu0 %1139
      %1141 = vrot.lane.b32.xlu0 %v1074, 127
      %v1142 = vpop.permute.xlu0 %1141
      %1143 = vrot.lane.b32.xlu0 %v1099, 127
      %v1144 = vpop.permute.xlu0 %1143
      %1145 = vrot.lane.b32.xlu0 %v1090, 127
      %v1146 = vpop.permute.xlu0 %1145
      %1147 = vrot.lane.b32.xlu0 %v1075, 127
      %v1148 = vpop.permute.xlu0 %1147
      %1149 = vrot.lane.b32.xlu0 %v1102, 127
      %v1150 = vpop.permute.xlu0 %1149
      %1151 = vrot.lane.b32.xlu0 %v1093, 127
      %v1152 = vpop.permute.xlu0 %1151
      %1153 = vrot.lane.b32.xlu0 %v1076, 127
      %v1154 = vpop.permute.xlu0 %1153
      %1155 = vrot.lane.b32.xlu0 %v1105, 127
      %v1156 = vpop.permute.xlu0 %1155
      %vm1157 = vcmask 1039360
      %v1158 = vsel %vm1157, %v1134, %v1136
      %v1159 = vsel %vm1157, %v1136, %v1138
      %v1160 = vsel %vm1157, %v1140, %v1142
      %v1161 = vsel %vm1157, %v1142, %v1144
      %v1162 = vsel %vm1157, %v1146, %v1148
      %v1163 = vsel %vm1157, %v1148, %v1150
      %v1164 = vsel %vm1157, %v1152, %v1154
      %v1165 = vsel %vm1157, %v1154, %v1156
      %vm1178 = vcmask 523264
      %v1180 = vsel %vm1178, %v1123, 0
      %v1183 = vsel %vm1178, %v1124, 0
      %1185 = vmatprep.subr.bf16.mxu0 %v1159
      %1186 = vmatpush1.bf16.msra.mxu0 %v1158
      %1187 = vmatprep.subr.bf16.mxu0 %v1161
      %1188 = vmatpush1.bf16.msra.mxu0 %v1160
      %1189 = vmatprep.subr.bf16.mxu0 %v1163
      %1190 = vmatpush1.bf16.msra.mxu0 %v1162
      %1191 = vmatprep.subr.bf16.mxu0 %v1165
      %1192 = vmatpush1.bf16.msra.mxu0 %v1164
      %1193 = vmatprep.subr.bf16.mxu0 0
      %1194 = vmatpush1.bf16.msra.mxu0 0
      %1195 = vmatprep.subr.bf16.mxu0 0
      %1196 = vmatpush1.bf16.msra.mxu0 0
      %1197 = vmatprep.subr.bf16.mxu0 0
      %1198 = vmatpush1.bf16.msra.mxu0 0
      %1199 = vmatprep.subr.bf16.mxu0 0
      %1200 = vmatpush1.bf16.msra.mxu0 0
      %1201 = vmatprep.subr.bf16.mxu0 0
      %1202 = vmatpush1.bf16.msra.mxu0 0
      %1203 = vmatprep.subr.bf16.mxu0 0
      %1204 = vmatpush1.bf16.msra.mxu0 0
      %1205 = vmatprep.subr.bf16.mxu0 0
      %1206 = vmatpush1.bf16.msra.mxu0 0
      %1207 = vmatprep.subr.bf16.mxu0 0
      %1208 = vmatpush1.bf16.msra.mxu0 0
      %1209 = vmatprep.subr.bf16.mxu0 0
      %1210 = vmatpush1.bf16.msra.mxu0 0
      %1211 = vmatprep.subr.bf16.mxu0 0
      %1212 = vmatpush1.bf16.msra.mxu0 0
      %1213 = vmatprep.subr.bf16.mxu0 0
      %1214 = vmatpush1.bf16.msra.mxu0 0
      %1215 = vmatprep.subr.bf16.mxu0 0
      %1216 = vmatpush1.bf16.msra.mxu0 0
      %1217 = vmatprep.mubr.bf16.mxu0 0
      %1218 = vmatmul.mubr.bf16.gmra.mrb[0].mxu0 %v1180
      %v1219 = vpop.f32.mrb[0].mxu0
      %v1220 = vadd.f32 0.0, %v1219
      %v1221 = vpop.f32.mrb[0].mxu0
      %v1222 = vadd.f32 0.0, %v1221
      %v1223 = vpop.f32.mrb[0].mxu0
      %v1224 = vadd.f32 0.0, %v1223
      %v1225 = vpop.f32.mrb[0].mxu0
      %v1226 = vadd.f32 0.0, %v1225
      %1227 = vmatprep.mubr.bf16.mxu0 0
      %1228 = vmatmul.mubr.bf16.gmra.mrb[0].mxu0 %v1183
      %v1229 = vpop.f32.mrb[0].mxu0
      %v1230 = vadd.f32 0.0, %v1229
      %v1231 = vpop.f32.mrb[0].mxu0
      %v1232 = vadd.f32 0.0, %v1231
      %v1233 = vpop.f32.mrb[0].mxu0
      %v1234 = vadd.f32 0.0, %v1233
      %v1235 = vpop.f32.mrb[0].mxu0
      %v1236 = vadd.f32 0.0, %v1235
      %1237 = vdwg.mxu0
      %1238 = vmatprep.subr.bf16.mxu0 0
      %1239 = vmatpush1.bf16.msra.mxu0 %v1138
      %1240 = vmatprep.subr.bf16.mxu0 0
      %1241 = vmatpush1.bf16.msra.mxu0 %v1144
      %1242 = vmatprep.subr.bf16.mxu0 0
      %1243 = vmatpush1.bf16.msra.mxu0 %v1150
      %1244 = vmatprep.subr.bf16.mxu0 0
      %1245 = vmatpush1.bf16.msra.mxu0 %v1156
      %1246 = vmatprep.subr.bf16.mxu0 0
      %1247 = vmatpush1.bf16.msra.mxu0 0
      %1248 = vmatprep.subr.bf16.mxu0 0
      %1249 = vmatpush1.bf16.msra.mxu0 0
      %1250 = vmatprep.subr.bf16.mxu0 0
      %1251 = vmatpush1.bf16.msra.mxu0 0
      %1252 = vmatprep.subr.bf16.mxu0 0
      %1253 = vmatpush1.bf16.msra.mxu0 0
      %1254 = vmatprep.subr.bf16.mxu0 0
      %1255 = vmatpush1.bf16.msra.mxu0 0
      %1256 = vmatprep.subr.bf16.mxu0 0
      %1257 = vmatpush1.bf16.msra.mxu0 0
      %1258 = vmatprep.subr.bf16.mxu0 0
      %1259 = vmatpush1.bf16.msra.mxu0 0
      %1260 = vmatprep.subr.bf16.mxu0 0
      %1261 = vmatpush1.bf16.msra.mxu0 0
      %1262 = vmatprep.subr.bf16.mxu0 0
      %1263 = vmatpush1.bf16.msra.mxu0 0
      %1264 = vmatprep.subr.bf16.mxu0 0
      %1265 = vmatpush1.bf16.msra.mxu0 0
      %1266 = vmatprep.subr.bf16.mxu0 0
      %1267 = vmatpush1.bf16.msra.mxu0 0
      %1268 = vmatprep.subr.bf16.mxu0 0
      %1269 = vmatpush1.bf16.msra.mxu0 0
      %1270 = vmatprep.mubr.bf16.mxu0 0
      %1271 = vmatmul.mubr.bf16.gmra.mrb[0].mxu0 %v1180
      %v1272 = vpop.f32.mrb[0].mxu0
      %v1273 = vadd.f32 0.0, %v1272
      %v1274 = vpop.f32.mrb[0].mxu0
      %v1275 = vpop.f32.mrb[0].mxu0
      %v1276 = vadd.f32 0.0, %v1275
      %v1277 = vpop.f32.mrb[0].mxu0
      %1278 = vmatprep.mubr.bf16.mxu0 0
      %1279 = vmatmul.mubr.bf16.gmra.mrb[0].mxu0 %v1183
      %v1280 = vpop.f32.mrb[0].mxu0
      %v1281 = vadd.f32 0.0, %v1280
      %v1282 = vpop.f32.mrb[0].mxu0
      %v1283 = vpop.f32.mrb[0].mxu0
      %v1284 = vadd.f32 0.0, %v1283
      %v1285 = vpop.f32.mrb[0].mxu0
      %1286 = vdwg.mxu0
      %v1291 = vunpack.c.l.b16 %v1107
      %v1292 = vunpack.c.l.b16 %v1108
      %v1293 = vunpack.c.l.b16 %v1109
      %v1294 = vunpack.c.l.b16 %v1110
      %v1295 = vpack.c.b16 %v1292, %v1291
      %v1296 = vpack.c.b16 %v1294, %v1293
      %v1298 = vsel %vm1178, %v1295, 0
      %v1301 = vsel %vm1178, %v1296, 0
      %1303 = vmatprep.subr.bf16.mxu0 %v1073
      %1304 = vmatpush1.bf16.msra.mxu0 %v1084
      %1305 = vmatprep.subr.bf16.mxu0 %v1074
      %1306 = vmatpush1.bf16.msra.mxu0 %v1087
      %1307 = vmatprep.subr.bf16.mxu0 %v1075
      %1308 = vmatpush1.bf16.msra.mxu0 %v1090
      %1309 = vmatprep.subr.bf16.mxu0 %v1076
      %1310 = vmatpush1.bf16.msra.mxu0 %v1093
      %1311 = vmatprep.subr.bf16.mxu0 0
      %1312 = vmatpush1.bf16.msra.mxu0 0
      %1313 = vmatprep.subr.bf16.mxu0 0
      %1314 = vmatpush1.bf16.msra.mxu0 0
      %1315 = vmatprep.subr.bf16.mxu0 0
      %1316 = vmatpush1.bf16.msra.mxu0 0
      %1317 = vmatprep.subr.bf16.mxu0 0
      %1318 = vmatpush1.bf16.msra.mxu0 0
      %1319 = vmatprep.subr.bf16.mxu0 0
      %1320 = vmatpush1.bf16.msra.mxu0 0
      %1321 = vmatprep.subr.bf16.mxu0 0
      %1322 = vmatpush1.bf16.msra.mxu0 0
      %1323 = vmatprep.subr.bf16.mxu0 0
      %1324 = vmatpush1.bf16.msra.mxu0 0
      %1325 = vmatprep.subr.bf16.mxu0 0
      %1326 = vmatpush1.bf16.msra.mxu0 0
      %1327 = vmatprep.subr.bf16.mxu0 0
      %1328 = vmatpush1.bf16.msra.mxu0 0
      %1329 = vmatprep.subr.bf16.mxu0 0
      %1330 = vmatpush1.bf16.msra.mxu0 0
      %1331 = vmatprep.subr.bf16.mxu0 0
      %1332 = vmatpush1.bf16.msra.mxu0 0
      %1333 = vmatprep.subr.bf16.mxu0 0
      %1334 = vmatpush1.bf16.msra.mxu0 0
      %1335 = vmatprep.mubr.bf16.mxu0 0
      %1336 = vmatmul.mubr.bf16.gmra.mrb[0].mxu0 %v1298
      %v1337 = vpop.f32.mrb[0].mxu0
      %v1338 = vadd.f32 %v1220, %v1337
      %v1339 = vpop.f32.mrb[0].mxu0
      %v1340 = vadd.f32 %v1222, %v1339
      %v1341 = vpop.f32.mrb[0].mxu0
      %v1342 = vadd.f32 %v1224, %v1341
      %v1343 = vpop.f32.mrb[0].mxu0
      %v1344 = vadd.f32 %v1226, %v1343
      %1345 = vmatprep.mubr.bf16.mxu0 0
      %1346 = vmatmul.mubr.bf16.gmra.mrb[0].mxu0 %v1301
      %v1347 = vpop.f32.mrb[0].mxu0
      %v1348 = vadd.f32 %v1230, %v1347
      %v1349 = vpop.f32.mrb[0].mxu0
      %v1350 = vadd.f32 %v1232, %v1349
      %v1351 = vpop.f32.mrb[0].mxu0
      %v1352 = vadd.f32 %v1234, %v1351
      %v1353 = vpop.f32.mrb[0].mxu0
      %v1354 = vadd.f32 %v1236, %v1353
      %1355 = vdwg.mxu0
      %1356 = vmatprep.subr.bf16.mxu0 0
      %1357 = vmatpush1.bf16.msra.mxu0 %v1096
      %1358 = vmatprep.subr.bf16.mxu0 0
      %1359 = vmatpush1.bf16.msra.mxu0 %v1099
      %1360 = vmatprep.subr.bf16.mxu0 0
      %1361 = vmatpush1.bf16.msra.mxu0 %v1102
      %1362 = vmatprep.subr.bf16.mxu0 0
      %1363 = vmatpush1.bf16.msra.mxu0 %v1105
      %1364 = vmatprep.subr.bf16.mxu0 0
      %1365 = vmatpush1.bf16.msra.mxu0 0
      %1366 = vmatprep.subr.bf16.mxu0 0
      %1367 = vmatpush1.bf16.msra.mxu0 0
      %1368 = vmatprep.subr.bf16.mxu0 0
      %1369 = vmatpush1.bf16.msra.mxu0 0
      %1370 = vmatprep.subr.bf16.mxu0 0
      %1371 = vmatpush1.bf16.msra.mxu0 0
      %1372 = vmatprep.subr.bf16.mxu0 0
      %1373 = vmatpush1.bf16.msra.mxu0 0
      %1374 = vmatprep.subr.bf16.mxu0 0
      %1375 = vmatpush1.bf16.msra.mxu0 0
      %1376 = vmatprep.subr.bf16.mxu0 0
      %1377 = vmatpush1.bf16.msra.mxu0 0
      %1378 = vmatprep.subr.bf16.mxu0 0
      %1379 = vmatpush1.bf16.msra.mxu0 0
      %1380 = vmatprep.subr.bf16.mxu0 0
      %1381 = vmatpush1.bf16.msra.mxu0 0
      %1382 = vmatprep.subr.bf16.mxu0 0
      %1383 = vmatpush1.bf16.msra.mxu0 0
      %1384 = vmatprep.subr.bf16.mxu0 0
      %1385 = vmatpush1.bf16.msra.mxu0 0
      %1386 = vmatprep.subr.bf16.mxu0 0
      %1387 = vmatpush1.bf16.msra.mxu0 0
      %1388 = vmatprep.mubr.bf16.mxu0 0
      %1389 = vmatmul.mubr.bf16.gmra.mrb[0].mxu0 %v1298
      %v1390 = vpop.f32.mrb[0].mxu0
      %v1391 = vadd.f32 %v1273, %v1390
      %v1392 = vpop.f32.mrb[0].mxu0
      %v1393 = vpop.f32.mrb[0].mxu0
      %v1394 = vadd.f32 %v1276, %v1393
      %v1395 = vpop.f32.mrb[0].mxu0
      %1396 = vmatprep.mubr.bf16.mxu0 0
      %1397 = vmatmul.mubr.bf16.gmra.mrb[0].mxu0 %v1301
      %v1398 = vpop.f32.mrb[0].mxu0
      %v1399 = vadd.f32 %v1281, %v1398
      %v1400 = vpop.f32.mrb[0].mxu0
      %v1401 = vpop.f32.mrb[0].mxu0
      %v1402 = vadd.f32 %v1284, %v1401
      %v1403 = vpop.f32.mrb[0].mxu0
      %1404 = vdwg.mxu0
      %v1405 = vld [vmem:[%s3 + $0x20] sm:$0xf]
      %v1406 = vld [vmem:[%s3 + $0x24] sm:$0xf]
      %v1407 = vld [vmem:[%s3 + $0x28] sm:$0xf]
      %v1408 = vld [vmem:[%s3 + $0x2c] sm:$0xf]
      %v1413 = vunpack.c.l.b16 %v1405
      %v1414 = vunpack.c.l.b16 %v1406
      %v1415 = vunpack.c.l.b16 %v1407
      %v1416 = vunpack.c.l.b16 %v1408
      %v1417 = vpack.c.b16 %v1414, %v1413
      %v1418 = vpack.c.b16 %v1416, %v1415
      %1419 = vrot.lane.b32.xlu0 %v1084, 126
      %v1420 = vpop.permute.xlu0 %1419
      %1421 = vrot.lane.b32.xlu0 %v1073, 126
      %v1422 = vpop.permute.xlu0 %1421
      %1423 = vrot.lane.b32.xlu0 %v1096, 126
      %v1424 = vpop.permute.xlu0 %1423
      %1425 = vrot.lane.b32.xlu0 %v1087, 126
      %v1426 = vpop.permute.xlu0 %1425
      %1427 = vrot.lane.b32.xlu0 %v1074, 126
      %v1428 = vpop.permute.xlu0 %1427
      %1429 = vrot.lane.b32.xlu0 %v1099, 126
      %v1430 = vpop.permute.xlu0 %1429
      %1431 = vrot.lane.b32.xlu0 %v1090, 126
      %v1432 = vpop.permute.xlu0 %1431
      %1433 = vrot.lane.b32.xlu0 %v1075, 126
      %v1434 = vpop.permute.xlu0 %1433
      %1435 = vrot.lane.b32.xlu0 %v1102, 126
      %v1436 = vpop.permute.xlu0 %1435
      %1437 = vrot.lane.b32.xlu0 %v1093, 126
      %v1438 = vpop.permute.xlu0 %1437
      %1439 = vrot.lane.b32.xlu0 %v1076, 126
      %v1440 = vpop.permute.xlu0 %1439
      %1441 = vrot.lane.b32.xlu0 %v1105, 126
      %v1442 = vpop.permute.xlu0 %1441
      %vm1443 = vcmask 1031168
      %v1444 = vsel %vm1443, %v1420, %v1422
      %v1445 = vsel %vm1443, %v1422, %v1424
      %v1446 = vsel %vm1443, %v1426, %v1428
      %v1447 = vsel %vm1443, %v1428, %v1430
      %v1448 = vsel %vm1443, %v1432, %v1434
      %v1449 = vsel %vm1443, %v1434, %v1436
      %v1450 = vsel %vm1443, %v1438, %v1440
      %v1451 = vsel %vm1443, %v1440, %v1442
      %v1465 = vsel %vm1178, %v1417, 0
      %v1468 = vsel %vm1178, %v1418, 0
      %1470 = vmatprep.subr.bf16.mxu0 %v1445
      %1471 = vmatpush1.bf16.msra.mxu0 %v1444
      %1472 = vmatprep.subr.bf16.mxu0 %v1447
      %1473 = vmatpush1.bf16.msra.mxu0 %v1446
      %1474 = vmatprep.subr.bf16.mxu0 %v1449
      %1475 = vmatpush1.bf16.msra.mxu0 %v1448
      %1476 = vmatprep.subr.bf16.mxu0 %v1451
      %1477 = vmatpush1.bf16.msra.mxu0 %v1450
      %1478 = vmatprep.subr.bf16.mxu0 0
      %1479 = vmatpush1.bf16.msra.mxu0 0
      %1480 = vmatprep.subr.bf16.mxu0 0
      %1481 = vmatpush1.bf16.msra.mxu0 0
      %1482 = vmatprep.subr.bf16.mxu0 0
      %1483 = vmatpush1.bf16.msra.mxu0 0
      %1484 = vmatprep.subr.bf16.mxu0 0
      %1485 = vmatpush1.bf16.msra.mxu0 0
      %1486 = vmatprep.subr.bf16.mxu0 0
      %1487 = vmatpush1.bf16.msra.mxu0 0
      %1488 = vmatprep.subr.bf16.mxu0 0
      %1489 = vmatpush1.bf16.msra.mxu0 0
      %1490 = vmatprep.subr.bf16.mxu0 0
      %1491 = vmatpush1.bf16.msra.mxu0 0
      %1492 = vmatprep.subr.bf16.mxu0 0
      %1493 = vmatpush1.bf16.msra.mxu0 0
      %1494 = vmatprep.subr.bf16.mxu0 0
      %1495 = vmatpush1.bf16.msra.mxu0 0
      %1496 = vmatprep.subr.bf16.mxu0 0
      %1497 = vmatpush1.bf16.msra.mxu0 0
      %1498 = vmatprep.subr.bf16.mxu0 0
      %1499 = vmatpush1.bf16.msra.mxu0 0
      %1500 = vmatprep.subr.bf16.mxu0 0
      %1501 = vmatpush1.bf16.msra.mxu0 0
      %1502 = vmatprep.mubr.bf16.mxu0 0
      %1503 = vmatmul.mubr.bf16.gmra.mrb[0].mxu0 %v1465
      %v1504 = vpop.f32.mrb[0].mxu0
      %v1505 = vadd.f32 0.0, %v1504
      %v1506 = vpop.f32.mrb[0].mxu0
      %v1507 = vadd.f32 0.0, %v1506
      %v1508 = vpop.f32.mrb[0].mxu0
      %v1509 = vadd.f32 0.0, %v1508
      %v1510 = vpop.f32.mrb[0].mxu0
      %v1511 = vadd.f32 0.0, %v1510
      %1512 = vmatprep.mubr.bf16.mxu0 0
      %1513 = vmatmul.mubr.bf16.gmra.mrb[0].mxu0 %v1468
      %v1514 = vpop.f32.mrb[0].mxu0
      %v1515 = vadd.f32 0.0, %v1514
      %v1516 = vpop.f32.mrb[0].mxu0
      %v1517 = vadd.f32 0.0, %v1516
      %v1518 = vpop.f32.mrb[0].mxu0
      %v1519 = vadd.f32 0.0, %v1518
      %v1520 = vpop.f32.mrb[0].mxu0
      %v1521 = vadd.f32 0.0, %v1520
      %1522 = vdwg.mxu0
      %1523 = vmatprep.subr.bf16.mxu0 0
      %1524 = vmatpush1.bf16.msra.mxu0 %v1424
      %1525 = vmatprep.subr.bf16.mxu0 0
      %1526 = vmatpush1.bf16.msra.mxu0 %v1430
      %1527 = vmatprep.subr.bf16.mxu0 0
      %1528 = vmatpush1.bf16.msra.mxu0 %v1436
      %1529 = vmatprep.subr.bf16.mxu0 0
      %1530 = vmatpush1.bf16.msra.mxu0 %v1442
      %1531 = vmatprep.subr.bf16.mxu0 0
      %1532 = vmatpush1.bf16.msra.mxu0 0
      %1533 = vmatprep.subr.bf16.mxu0 0
      %1534 = vmatpush1.bf16.msra.mxu0 0
      %1535 = vmatprep.subr.bf16.mxu0 0
      %1536 = vmatpush1.bf16.msra.mxu0 0
      %1537 = vmatprep.subr.bf16.mxu0 0
      %1538 = vmatpush1.bf16.msra.mxu0 0
      %1539 = vmatprep.subr.bf16.mxu0 0
      %1540 = vmatpush1.bf16.msra.mxu0 0
      %1541 = vmatprep.subr.bf16.mxu0 0
      %1542 = vmatpush1.bf16.msra.mxu0 0
      %1543 = vmatprep.subr.bf16.mxu0 0
      %1544 = vmatpush1.bf16.msra.mxu0 0
      %1545 = vmatprep.subr.bf16.mxu0 0
      %1546 = vmatpush1.bf16.msra.mxu0 0
      %1547 = vmatprep.subr.bf16.mxu0 0
      %1548 = vmatpush1.bf16.msra.mxu0 0
      %1549 = vmatprep.subr.bf16.mxu0 0
      %1550 = vmatpush1.bf16.msra.mxu0 0
      %1551 = vmatprep.subr.bf16.mxu0 0
      %1552 = vmatpush1.bf16.msra.mxu0 0
      %1553 = vmatprep.subr.bf16.mxu0 0
      %1554 = vmatpush1.bf16.msra.mxu0 0
      %1555 = vmatprep.mubr.bf16.mxu0 0
      %1556 = vmatmul.mubr.bf16.gmra.mrb[0].mxu0 %v1465
      %v1557 = vpop.f32.mrb[0].mxu0
      %v1558 = vadd.f32 0.0, %v1557
      %v1559 = vpop.f32.mrb[0].mxu0
      %v1560 = vpop.f32.mrb[0].mxu0
      %v1561 = vadd.f32 0.0, %v1560
      %v1562 = vpop.f32.mrb[0].mxu0
      %1563 = vmatprep.mubr.bf16.mxu0 0
      %1564 = vmatmul.mubr.bf16.gmra.mrb[0].mxu0 %v1468
      %v1565 = vpop.f32.mrb[0].mxu0
      %v1566 = vadd.f32 0.0, %v1565
      %v1567 = vpop.f32.mrb[0].mxu0
      %v1568 = vpop.f32.mrb[0].mxu0
      %v1569 = vadd.f32 0.0, %v1568
      %v1570 = vpop.f32.mrb[0].mxu0
      %1571 = vdwg.mxu0
      %v1572 = vadd.f32 %v1338, %v1505
      %v1573 = vadd.f32 %v1340, %v1507
      %v1574 = vadd.f32 %v1391, %v1558
      %v1575 = vadd.f32 %v1342, %v1509
      %v1576 = vadd.f32 %v1344, %v1511
      %v1577 = vadd.f32 %v1394, %v1561
      %v1578 = vadd.f32 %v1348, %v1515
      %v1579 = vadd.f32 %v1350, %v1517
      %v1580 = vadd.f32 %v1399, %v1566
      %v1581 = vadd.f32 %v1352, %v1519
      %v1582 = vadd.f32 %v1354, %v1521
      %v1583 = vadd.f32 %v1402, %v1569
      %v1584 = vld [vmem:[%s3 + $0x30] sm:$0xf]
      %v1585 = vld [vmem:[%s3 + $0x34] sm:$0xf]
      %v1586 = vld [vmem:[%s3 + $0x38] sm:$0xf]
      %v1587 = vld [vmem:[%s3 + $0x3c] sm:$0xf]
      %v1592 = vunpack.c.l.b16 %v1584
      %v1593 = vunpack.c.l.b16 %v1585
      %v1594 = vunpack.c.l.b16 %v1586
      %v1595 = vunpack.c.l.b16 %v1587
      %v1596 = vpack.c.b16 %v1593, %v1592
      %v1597 = vpack.c.b16 %v1595, %v1594
      %1598 = vrot.lane.b32.xlu0 %v1084, 110
      %v1599 = vpop.permute.xlu0 %1598
      %1600 = vrot.lane.b32.xlu0 %v1073, 110
      %v1601 = vpop.permute.xlu0 %1600
      %1602 = vrot.lane.b32.xlu0 %v1096, 110
      %v1603 = vpop.permute.xlu0 %1602
      %1604 = vrot.lane.b32.xlu0 %v1087, 110
      %v1605 = vpop.permute.xlu0 %1604
      %1606 = vrot.lane.b32.xlu0 %v1074, 110
      %v1607 = vpop.permute.xlu0 %1606
      %1608 = vrot.lane.b32.xlu0 %v1099, 110
      %v1609 = vpop.permute.xlu0 %1608
      %1610 = vrot.lane.b32.xlu0 %v1090, 110
      %v1611 = vpop.permute.xlu0 %1610
      %1612 = vrot.lane.b32.xlu0 %v1075, 110
      %v1613 = vpop.permute.xlu0 %1612
      %1614 = vrot.lane.b32.xlu0 %v1102, 110
      %v1615 = vpop.permute.xlu0 %1614
      %1616 = vrot.lane.b32.xlu0 %v1093, 110
      %v1617 = vpop.permute.xlu0 %1616
      %1618 = vrot.lane.b32.xlu0 %v1076, 110
      %v1619 = vpop.permute.xlu0 %1618
      %1620 = vrot.lane.b32.xlu0 %v1105, 110
      %v1621 = vpop.permute.xlu0 %1620
      %vm1622 = vcmask 900096
      %v1623 = vsel %vm1622, %v1599, %v1601
      %v1624 = vsel %vm1622, %v1601, %v1603
      %v1625 = vsel %vm1622, %v1605, %v1607
      %v1626 = vsel %vm1622, %v1607, %v1609
      %v1627 = vsel %vm1622, %v1611, %v1613
      %v1628 = vsel %vm1622, %v1613, %v1615
      %v1629 = vsel %vm1622, %v1617, %v1619
      %v1630 = vsel %vm1622, %v1619, %v1621
      %v1644 = vsel %vm1178, %v1596, 0
      %v1647 = vsel %vm1178, %v1597, 0
      %1649 = vmatprep.subr.bf16.mxu0 %v1624
      %1650 = vmatpush1.bf16.msra.mxu0 %v1623
      %1651 = vmatprep.subr.bf16.mxu0 %v1626
      %1652 = vmatpush1.bf16.msra.mxu0 %v1625
      %1653 = vmatprep.subr.bf16.mxu0 %v1628
      %1654 = vmatpush1.bf16.msra.mxu0 %v1627
      %1655 = vmatprep.subr.bf16.mxu0 %v1630
      %1656 = vmatpush1.bf16.msra.mxu0 %v1629
      %1657 = vmatprep.subr.bf16.mxu0 0
      %1658 = vmatpush1.bf16.msra.mxu0 0
      %1659 = vmatprep.subr.bf16.mxu0 0
      %1660 = vmatpush1.bf16.msra.mxu0 0
      %1661 = vmatprep.subr.bf16.mxu0 0
      %1662 = vmatpush1.bf16.msra.mxu0 0
      %1663 = vmatprep.subr.bf16.mxu0 0
      %1664 = vmatpush1.bf16.msra.mxu0 0
      %1665 = vmatprep.subr.bf16.mxu0 0
      %1666 = vmatpush1.bf16.msra.mxu0 0
      %1667 = vmatprep.subr.bf16.mxu0 0
      %1668 = vmatpush1.bf16.msra.mxu0 0
      %1669 = vmatprep.subr.bf16.mxu0 0
      %1670 = vmatpush1.bf16.msra.mxu0 0
      %1671 = vmatprep.subr.bf16.mxu0 0
      %1672 = vmatpush1.bf16.msra.mxu0 0
      %1673 = vmatprep.subr.bf16.mxu0 0
      %1674 = vmatpush1.bf16.msra.mxu0 0
      %1675 = vmatprep.subr.bf16.mxu0 0
      %1676 = vmatpush1.bf16.msra.mxu0 0
      %1677 = vmatprep.subr.bf16.mxu0 0
      %1678 = vmatpush1.bf16.msra.mxu0 0
      %1679 = vmatprep.subr.bf16.mxu0 0
      %1680 = vmatpush1.bf16.msra.mxu0 0
      %1681 = vmatprep.mubr.bf16.mxu0 0
      %1682 = vmatmul.mubr.bf16.gmra.mrb[0].mxu0 %v1644
      %v1683 = vpop.f32.mrb[0].mxu0
      %v1684 = vadd.f32 0.0, %v1683
      %v1685 = vpop.f32.mrb[0].mxu0
      %v1686 = vadd.f32 0.0, %v1685
      %v1687 = vpop.f32.mrb[0].mxu0
      %v1688 = vadd.f32 0.0, %v1687
      %v1689 = vpop.f32.mrb[0].mxu0
      %v1690 = vadd.f32 0.0, %v1689
      %1691 = vmatprep.mubr.bf16.mxu0 0
      %1692 = vmatmul.mubr.bf16.gmra.mrb[0].mxu0 %v1647
      %v1693 = vpop.f32.mrb[0].mxu0
      %v1694 = vadd.f32 0.0, %v1693
      %v1695 = vpop.f32.mrb[0].mxu0
      %v1696 = vadd.f32 0.0, %v1695
      %v1697 = vpop.f32.mrb[0].mxu0
      %v1698 = vadd.f32 0.0, %v1697
      %v1699 = vpop.f32.mrb[0].mxu0
      %v1700 = vadd.f32 0.0, %v1699
      %1701 = vdwg.mxu0
      %1702 = vmatprep.subr.bf16.mxu0 0
      %1703 = vmatpush1.bf16.msra.mxu0 %v1603
      %1704 = vmatprep.subr.bf16.mxu0 0
      %1705 = vmatpush1.bf16.msra.mxu0 %v1609
      %1706 = vmatprep.subr.bf16.mxu0 0
      %1707 = vmatpush1.bf16.msra.mxu0 %v1615
      %1708 = vmatprep.subr.bf16.mxu0 0
      %1709 = vmatpush1.bf16.msra.mxu0 %v1621
      %1710 = vmatprep.subr.bf16.mxu0 0
      %1711 = vmatpush1.bf16.msra.mxu0 0
      %1712 = vmatprep.subr.bf16.mxu0 0
      %1713 = vmatpush1.bf16.msra.mxu0 0
      %1714 = vmatprep.subr.bf16.mxu0 0
      %1715 = vmatpush1.bf16.msra.mxu0 0
      %1716 = vmatprep.subr.bf16.mxu0 0
      %1717 = vmatpush1.bf16.msra.mxu0 0
      %1718 = vmatprep.subr.bf16.mxu0 0
      %1719 = vmatpush1.bf16.msra.mxu0 0
      %1720 = vmatprep.subr.bf16.mxu0 0
      %1721 = vmatpush1.bf16.msra.mxu0 0
      %1722 = vmatprep.subr.bf16.mxu0 0
      %1723 = vmatpush1.bf16.msra.mxu0 0
      %1724 = vmatprep.subr.bf16.mxu0 0
      %1725 = vmatpush1.bf16.msra.mxu0 0
      %1726 = vmatprep.subr.bf16.mxu0 0
      %1727 = vmatpush1.bf16.msra.mxu0 0
      %1728 = vmatprep.subr.bf16.mxu0 0
      %1729 = vmatpush1.bf16.msra.mxu0 0
      %1730 = vmatprep.subr.bf16.mxu0 0
      %1731 = vmatpush1.bf16.msra.mxu0 0
      %1732 = vmatprep.subr.bf16.mxu0 0
      %1733 = vmatpush1.bf16.msra.mxu0 0
      %1734 = vmatprep.mubr.bf16.mxu0 0
      %1735 = vmatmul.mubr.bf16.gmra.mrb[0].mxu0 %v1644
      %v1736 = vpop.f32.mrb[0].mxu0
      %v1737 = vadd.f32 0.0, %v1736
      %v1738 = vpop.f32.mrb[0].mxu0
      %v1739 = vpop.f32.mrb[0].mxu0
      %v1740 = vadd.f32 0.0, %v1739
      %v1741 = vpop.f32.mrb[0].mxu0
      %1742 = vmatprep.mubr.bf16.mxu0 0
      %1743 = vmatmul.mubr.bf16.gmra.mrb[0].mxu0 %v1647
      %v1744 = vpop.f32.mrb[0].mxu0
      %v1745 = vadd.f32 0.0, %v1744
      %v1746 = vpop.f32.mrb[0].mxu0
      %v1747 = vpop.f32.mrb[0].mxu0
      %v1748 = vadd.f32 0.0, %v1747
      %v1749 = vpop.f32.mrb[0].mxu0
      %1750 = vdwg.mxu0
      %v1751 = vadd.f32 %v1572, %v1684
      %v1752 = vadd.f32 %v1573, %v1686
      %v1753 = vadd.f32 %v1574, %v1737
      %v1754 = vadd.f32 %v1575, %v1688
      %v1755 = vadd.f32 %v1576, %v1690
      %v1756 = vadd.f32 %v1577, %v1740
      %v1757 = vadd.f32 %v1578, %v1694
      %v1758 = vadd.f32 %v1579, %v1696
      %v1759 = vadd.f32 %v1580, %v1745
      %v1760 = vadd.f32 %v1581, %v1698
      %v1761 = vadd.f32 %v1582, %v1700
      %v1762 = vadd.f32 %v1583, %v1748
      %v1763 = vld [vmem:[%s3 + $0x40] sm:$0xf]
      %v1764 = vld [vmem:[%s3 + $0x44] sm:$0xf]
      %v1765 = vld [vmem:[%s3 + $0x48] sm:$0xf]
      %v1766 = vld [vmem:[%s3 + $0x4c] sm:$0xf]
      %v1771 = vunpack.c.l.b16 %v1763
      %v1772 = vunpack.c.l.b16 %v1764
      %v1773 = vunpack.c.l.b16 %v1765
      %v1774 = vunpack.c.l.b16 %v1766
      %v1775 = vpack.c.b16 %v1772, %v1771
      %v1776 = vpack.c.b16 %v1774, %v1773
      %1777 = vrot.lane.b32.xlu0 %v1084, 109
      %v1778 = vpop.permute.xlu0 %1777
      %1779 = vrot.lane.b32.xlu0 %v1073, 109
      %v1780 = vpop.permute.xlu0 %1779
      %1781 = vrot.lane.b32.xlu0 %v1096, 109
      %v1782 = vpop.permute.xlu0 %1781
      %1783 = vrot.lane.b32.xlu0 %v1087, 109
      %v1784 = vpop.permute.xlu0 %1783
      %1785 = vrot.lane.b32.xlu0 %v1074, 109
      %v1786 = vpop.permute.xlu0 %1785
      %1787 = vrot.lane.b32.xlu0 %v1099, 109
      %v1788 = vpop.permute.xlu0 %1787
      %1789 = vrot.lane.b32.xlu0 %v1090, 109
      %v1790 = vpop.permute.xlu0 %1789
      %1791 = vrot.lane.b32.xlu0 %v1075, 109
      %v1792 = vpop.permute.xlu0 %1791
      %1793 = vrot.lane.b32.xlu0 %v1102, 109
      %v1794 = vpop.permute.xlu0 %1793
      %1795 = vrot.lane.b32.xlu0 %v1093, 109
      %v1796 = vpop.permute.xlu0 %1795
      %1797 = vrot.lane.b32.xlu0 %v1076, 109
      %v1798 = vpop.permute.xlu0 %1797
      %1799 = vrot.lane.b32.xlu0 %v1105, 109
      %v1800 = vpop.permute.xlu0 %1799
      %vm1801 = vcmask 891904
      %v1802 = vsel %vm1801, %v1778, %v1780
      %v1803 = vsel %vm1801, %v1780, %v1782
      %v1804 = vsel %vm1801, %v1784, %v1786
      %v1805 = vsel %vm1801, %v1786, %v1788
      %v1806 = vsel %vm1801, %v1790, %v1792
      %v1807 = vsel %vm1801, %v1792, %v1794
      %v1808 = vsel %vm1801, %v1796, %v1798
      %v1809 = vsel %vm1801, %v1798, %v1800
      %v1823 = vsel %vm1178, %v1775, 0
      %v1826 = vsel %vm1178, %v1776, 0
      %1828 = vmatprep.subr.bf16.mxu0 %v1803
      %1829 = vmatpush1.bf16.msra.mxu0 %v1802
      %1830 = vmatprep.subr.bf16.mxu0 %v1805
      %1831 = vmatpush1.bf16.msra.mxu0 %v1804
      %1832 = vmatprep.subr.bf16.mxu0 %v1807
      %1833 = vmatpush1.bf16.msra.mxu0 %v1806
      %1834 = vmatprep.subr.bf16.mxu0 %v1809
      %1835 = vmatpush1.bf16.msra.mxu0 %v1808
      %1836 = vmatprep.subr.bf16.mxu0 0
      %1837 = vmatpush1.bf16.msra.mxu0 0
      %1838 = vmatprep.subr.bf16.mxu0 0
      %1839 = vmatpush1.bf16.msra.mxu0 0
      %1840 = vmatprep.subr.bf16.mxu0 0
      %1841 = vmatpush1.bf16.msra.mxu0 0
      %1842 = vmatprep.subr.bf16.mxu0 0
      %1843 = vmatpush1.bf16.msra.mxu0 0
      %1844 = vmatprep.subr.bf16.mxu0 0
      %1845 = vmatpush1.bf16.msra.mxu0 0
      %1846 = vmatprep.subr.bf16.mxu0 0
      %1847 = vmatpush1.bf16.msra.mxu0 0
      %1848 = vmatprep.subr.bf16.mxu0 0
      %1849 = vmatpush1.bf16.msra.mxu0 0
      %1850 = vmatprep.subr.bf16.mxu0 0
      %1851 = vmatpush1.bf16.msra.mxu0 0
      %1852 = vmatprep.subr.bf16.mxu0 0
      %1853 = vmatpush1.bf16.msra.mxu0 0
      %1854 = vmatprep.subr.bf16.mxu0 0
      %1855 = vmatpush1.bf16.msra.mxu0 0
      %1856 = vmatprep.subr.bf16.mxu0 0
      %1857 = vmatpush1.bf16.msra.mxu0 0
      %1858 = vmatprep.subr.bf16.mxu0 0
      %1859 = vmatpush1.bf16.msra.mxu0 0
      %1860 = vmatprep.mubr.bf16.mxu0 0
      %1861 = vmatmul.mubr.bf16.gmra.mrb[0].mxu0 %v1823
      %v1862 = vpop.f32.mrb[0].mxu0
      %v1863 = vadd.f32 0.0, %v1862
      %v1864 = vpop.f32.mrb[0].mxu0
      %v1865 = vadd.f32 0.0, %v1864
      %v1866 = vpop.f32.mrb[0].mxu0
      %v1867 = vadd.f32 0.0, %v1866
      %v1868 = vpop.f32.mrb[0].mxu0
      %v1869 = vadd.f32 0.0, %v1868
      %1870 = vmatprep.mubr.bf16.mxu0 0
      %1871 = vmatmul.mubr.bf16.gmra.mrb[0].mxu0 %v1826
      %v1872 = vpop.f32.mrb[0].mxu0
      %v1873 = vadd.f32 0.0, %v1872
      %v1874 = vpop.f32.mrb[0].mxu0
      %v1875 = vadd.f32 0.0, %v1874
      %v1876 = vpop.f32.mrb[0].mxu0
      %v1877 = vadd.f32 0.0, %v1876
      %v1878 = vpop.f32.mrb[0].mxu0
      %v1879 = vadd.f32 0.0, %v1878
      %1880 = vdwg.mxu0
      %1881 = vmatprep.subr.bf16.mxu0 0
      %1882 = vmatpush1.bf16.msra.mxu0 %v1782
      %1883 = vmatprep.subr.bf16.mxu0 0
      %1884 = vmatpush1.bf16.msra.mxu0 %v1788
      %1885 = vmatprep.subr.bf16.mxu0 0
      %1886 = vmatpush1.bf16.msra.mxu0 %v1794
      %1887 = vmatprep.subr.bf16.mxu0 0
      %1888 = vmatpush1.bf16.msra.mxu0 %v1800
      %1889 = vmatprep.subr.bf16.mxu0 0
      %1890 = vmatpush1.bf16.msra.mxu0 0
      %1891 = vmatprep.subr.bf16.mxu0 0
      %1892 = vmatpush1.bf16.msra.mxu0 0
      %1893 = vmatprep.subr.bf16.mxu0 0
      %1894 = vmatpush1.bf16.msra.mxu0 0
      %1895 = vmatprep.subr.bf16.mxu0 0
      %1896 = vmatpush1.bf16.msra.mxu0 0
      %1897 = vmatprep.subr.bf16.mxu0 0
      %1898 = vmatpush1.bf16.msra.mxu0 0
      %1899 = vmatprep.subr.bf16.mxu0 0
      %1900 = vmatpush1.bf16.msra.mxu0 0
      %1901 = vmatprep.subr.bf16.mxu0 0
      %1902 = vmatpush1.bf16.msra.mxu0 0
      %1903 = vmatprep.subr.bf16.mxu0 0
      %1904 = vmatpush1.bf16.msra.mxu0 0
      %1905 = vmatprep.subr.bf16.mxu0 0
      %1906 = vmatpush1.bf16.msra.mxu0 0
      %1907 = vmatprep.subr.bf16.mxu0 0
      %1908 = vmatpush1.bf16.msra.mxu0 0
      %1909 = vmatprep.subr.bf16.mxu0 0
      %1910 = vmatpush1.bf16.msra.mxu0 0
      %1911 = vmatprep.subr.bf16.mxu0 0
      %1912 = vmatpush1.bf16.msra.mxu0 0
      %1913 = vmatprep.mubr.bf16.mxu0 0
      %1914 = vmatmul.mubr.bf16.gmra.mrb[0].mxu0 %v1823
      %v1915 = vpop.f32.mrb[0].mxu0
      %v1916 = vadd.f32 0.0, %v1915
      %v1917 = vpop.f32.mrb[0].mxu0
      %v1918 = vpop.f32.mrb[0].mxu0
      %v1919 = vadd.f32 0.0, %v1918
      %v1920 = vpop.f32.mrb[0].mxu0
      %1921 = vmatprep.mubr.bf16.mxu0 0
      %1922 = vmatmul.mubr.bf16.gmra.mrb[0].mxu0 %v1826
      %v1923 = vpop.f32.mrb[0].mxu0
      %v1924 = vadd.f32 0.0, %v1923
      %v1925 = vpop.f32.mrb[0].mxu0
      %v1926 = vpop.f32.mrb[0].mxu0
      %v1927 = vadd.f32 0.0, %v1926
      %v1928 = vpop.f32.mrb[0].mxu0
      %1929 = vdwg.mxu0
      %v1930 = vadd.f32 %v1751, %v1863
      %v1931 = vadd.f32 %v1752, %v1865
      %v1932 = vadd.f32 %v1753, %v1916
      %v1933 = vadd.f32 %v1754, %v1867
      %v1934 = vadd.f32 %v1755, %v1869
      %v1935 = vadd.f32 %v1756, %v1919
      %v1936 = vadd.f32 %v1757, %v1873
      %v1937 = vadd.f32 %v1758, %v1875
      %v1938 = vadd.f32 %v1759, %v1924
      %v1939 = vadd.f32 %v1760, %v1877
      %v1940 = vadd.f32 %v1761, %v1879
      %v1941 = vadd.f32 %v1762, %v1927
      %v1942 = vld [vmem:[%s3 + $0x50] sm:$0xf]
      %v1943 = vld [vmem:[%s3 + $0x54] sm:$0xf]
      %v1944 = vld [vmem:[%s3 + $0x58] sm:$0xf]
      %v1945 = vld [vmem:[%s3 + $0x5c] sm:$0xf]
      %v1950 = vunpack.c.l.b16 %v1942
      %v1951 = vunpack.c.l.b16 %v1943
      %v1952 = vunpack.c.l.b16 %v1944
      %v1953 = vunpack.c.l.b16 %v1945
      %v1954 = vpack.c.b16 %v1951, %v1950
      %v1955 = vpack.c.b16 %v1953, %v1952
      %1956 = vrot.lane.b32.xlu0 %v1084, 108
      %v1957 = vpop.permute.xlu0 %1956
      %1958 = vrot.lane.b32.xlu0 %v1073, 108
      %v1959 = vpop.permute.xlu0 %1958
      %1960 = vrot.lane.b32.xlu0 %v1096, 108
      %v1961 = vpop.permute.xlu0 %1960
      %1962 = vrot.lane.b32.xlu0 %v1087, 108
      %v1963 = vpop.permute.xlu0 %1962
      %1964 = vrot.lane.b32.xlu0 %v1074, 108
      %v1965 = vpop.permute.xlu0 %1964
      %1966 = vrot.lane.b32.xlu0 %v1099, 108
      %v1967 = vpop.permute.xlu0 %1966
      %1968 = vrot.lane.b32.xlu0 %v1090, 108
      %v1969 = vpop.permute.xlu0 %1968
      %1970 = vrot.lane.b32.xlu0 %v1075, 108
      %v1971 = vpop.permute.xlu0 %1970
      %1972 = vrot.lane.b32.xlu0 %v1102, 108
      %v1973 = vpop.permute.xlu0 %1972
      %1974 = vrot.lane.b32.xlu0 %v1093, 108
      %v1975 = vpop.permute.xlu0 %1974
      %1976 = vrot.lane.b32.xlu0 %v1076, 108
      %v1977 = vpop.permute.xlu0 %1976
      %1978 = vrot.lane.b32.xlu0 %v1105, 108
      %v1979 = vpop.permute.xlu0 %1978
      %vm1980 = vcmask 883712
      %v1981 = vsel %vm1980, %v1957, %v1959
      %v1982 = vsel %vm1980, %v1959, %v1961
      %v1983 = vsel %vm1980, %v1963, %v1965
      %v1984 = vsel %vm1980, %v1965, %v1967
      %v1985 = vsel %vm1980, %v1969, %v1971
      %v1986 = vsel %vm1980, %v1971, %v1973
      %v1987 = vsel %vm1980, %v1975, %v1977
      %v1988 = vsel %vm1980, %v1977, %v1979
      %v2002 = vsel %vm1178, %v1954, 0
      %v2005 = vsel %vm1178, %v1955, 0
      %2007 = vmatprep.subr.bf16.mxu0 %v1982
      %2008 = vmatpush1.bf16.msra.mxu0 %v1981
      %2009 = vmatprep.subr.bf16.mxu0 %v1984
      %2010 = vmatpush1.bf16.msra.mxu0 %v1983
      %2011 = vmatprep.subr.bf16.mxu0 %v1986
      %2012 = vmatpush1.bf16.msra.mxu0 %v1985
      %2013 = vmatprep.subr.bf16.mxu0 %v1988
      %2014 = vmatpush1.bf16.msra.mxu0 %v1987
      %2015 = vmatprep.subr.bf16.mxu0 0
      %2016 = vmatpush1.bf16.msra.mxu0 0
      %2017 = vmatprep.subr.bf16.mxu0 0
      %2018 = vmatpush1.bf16.msra.mxu0 0
      %2019 = vmatprep.subr.bf16.mxu0 0
      %2020 = vmatpush1.bf16.msra.mxu0 0
      %2021 = vmatprep.subr.bf16.mxu0 0
      %2022 = vmatpush1.bf16.msra.mxu0 0
      %2023 = vmatprep.subr.bf16.mxu0 0
      %2024 = vmatpush1.bf16.msra.mxu0 0
      %2025 = vmatprep.subr.bf16.mxu0 0
      %2026 = vmatpush1.bf16.msra.mxu0 0
      %2027 = vmatprep.subr.bf16.mxu0 0
      %2028 = vmatpush1.bf16.msra.mxu0 0
      %2029 = vmatprep.subr.bf16.mxu0 0
      %2030 = vmatpush1.bf16.msra.mxu0 0
      %2031 = vmatprep.subr.bf16.mxu0 0
      %2032 = vmatpush1.bf16.msra.mxu0 0
      %2033 = vmatprep.subr.bf16.mxu0 0
      %2034 = vmatpush1.bf16.msra.mxu0 0
      %2035 = vmatprep.subr.bf16.mxu0 0
      %2036 = vmatpush1.bf16.msra.mxu0 0
      %2037 = vmatprep.subr.bf16.mxu0 0
      %2038 = vmatpush1.bf16.msra.mxu0 0
      %2039 = vmatprep.mubr.bf16.mxu0 0
      %2040 = vmatmul.mubr.bf16.gmra.mrb[0].mxu0 %v2002
      %v2041 = vpop.f32.mrb[0].mxu0
      %v2042 = vadd.f32 0.0, %v2041
      %v2043 = vpop.f32.mrb[0].mxu0
      %v2044 = vadd.f32 0.0, %v2043
      %v2045 = vpop.f32.mrb[0].mxu0
      %v2046 = vadd.f32 0.0, %v2045
      %v2047 = vpop.f32.mrb[0].mxu0
      %v2048 = vadd.f32 0.0, %v2047
      %2049 = vmatprep.mubr.bf16.mxu0 0
      %2050 = vmatmul.mubr.bf16.gmra.mrb[0].mxu0 %v2005
      %v2051 = vpop.f32.mrb[0].mxu0
      %v2052 = vadd.f32 0.0, %v2051
      %v2053 = vpop.f32.mrb[0].mxu0
      %v2054 = vadd.f32 0.0, %v2053
      %v2055 = vpop.f32.mrb[0].mxu0
      %v2056 = vadd.f32 0.0, %v2055
      %v2057 = vpop.f32.mrb[0].mxu0
      %v2058 = vadd.f32 0.0, %v2057
      %2059 = vdwg.mxu0
      %2060 = vmatprep.subr.bf16.mxu0 0
      %2061 = vmatpush1.bf16.msra.mxu0 %v1961
      %2062 = vmatprep.subr.bf16.mxu0 0
      %2063 = vmatpush1.bf16.msra.mxu0 %v1967
      %2064 = vmatprep.subr.bf16.mxu0 0
      %2065 = vmatpush1.bf16.msra.mxu0 %v1973
      %2066 = vmatprep.subr.bf16.mxu0 0
      %2067 = vmatpush1.bf16.msra.mxu0 %v1979
      %2068 = vmatprep.subr.bf16.mxu0 0
      %2069 = vmatpush1.bf16.msra.mxu0 0
      %2070 = vmatprep.subr.bf16.mxu0 0
      %2071 = vmatpush1.bf16.msra.mxu0 0
      %2072 = vmatprep.subr.bf16.mxu0 0
      %2073 = vmatpush1.bf16.msra.mxu0 0
      %2074 = vmatprep.subr.bf16.mxu0 0
      %2075 = vmatpush1.bf16.msra.mxu0 0
      %2076 = vmatprep.subr.bf16.mxu0 0
      %2077 = vmatpush1.bf16.msra.mxu0 0
      %2078 = vmatprep.subr.bf16.mxu0 0
      %2079 = vmatpush1.bf16.msra.mxu0 0
      %2080 = vmatprep.subr.bf16.mxu0 0
      %2081 = vmatpush1.bf16.msra.mxu0 0
      %2082 = vmatprep.subr.bf16.mxu0 0
      %2083 = vmatpush1.bf16.msra.mxu0 0
      %2084 = vmatprep.subr.bf16.mxu0 0
      %2085 = vmatpush1.bf16.msra.mxu0 0
      %2086 = vmatprep.subr.bf16.mxu0 0
      %2087 = vmatpush1.bf16.msra.mxu0 0
      %2088 = vmatprep.subr.bf16.mxu0 0
      %2089 = vmatpush1.bf16.msra.mxu0 0
      %2090 = vmatprep.subr.bf16.mxu0 0
      %2091 = vmatpush1.bf16.msra.mxu0 0
      %2092 = vmatprep.mubr.bf16.mxu0 0
      %2093 = vmatmul.mubr.bf16.gmra.mrb[0].mxu0 %v2002
      %v2094 = vpop.f32.mrb[0].mxu0
      %v2095 = vadd.f32 0.0, %v2094
      %v2096 = vpop.f32.mrb[0].mxu0
      %v2097 = vpop.f32.mrb[0].mxu0
      %v2098 = vadd.f32 0.0, %v2097
      %v2099 = vpop.f32.mrb[0].mxu0
      %2100 = vmatprep.mubr.bf16.mxu0 0
      %2101 = vmatmul.mubr.bf16.gmra.mrb[0].mxu0 %v2005
      %v2102 = vpop.f32.mrb[0].mxu0
      %v2103 = vadd.f32 0.0, %v2102
      %v2104 = vpop.f32.mrb[0].mxu0
      %v2105 = vpop.f32.mrb[0].mxu0
      %v2106 = vadd.f32 0.0, %v2105
      %v2107 = vpop.f32.mrb[0].mxu0
      %2108 = vdwg.mxu0
      %v2109 = vadd.f32 %v1930, %v2042
      %v2110 = vadd.f32 %v1931, %v2044
      %v2111 = vadd.f32 %v1932, %v2095
      %v2112 = vadd.f32 %v1933, %v2046
      %v2113 = vadd.f32 %v1934, %v2048
      %v2114 = vadd.f32 %v1935, %v2098
      %v2115 = vadd.f32 %v1936, %v2052
      %v2116 = vadd.f32 %v1937, %v2054
      %v2117 = vadd.f32 %v1938, %v2103
      %v2118 = vadd.f32 %v1939, %v2056
      %v2119 = vadd.f32 %v1940, %v2058
      %v2120 = vadd.f32 %v1941, %v2106
      %v2121 = vld [vmem:[%s3 + $0x60] sm:$0xf]
      %v2122 = vld [vmem:[%s3 + $0x64] sm:$0xf]
      %v2123 = vld [vmem:[%s3 + $0x68] sm:$0xf]
      %v2124 = vld [vmem:[%s3 + $0x6c] sm:$0xf]
      %v2129 = vunpack.c.l.b16 %v2121
      %v2130 = vunpack.c.l.b16 %v2122
      %v2131 = vunpack.c.l.b16 %v2123
      %v2132 = vunpack.c.l.b16 %v2124
      %v2133 = vpack.c.b16 %v2130, %v2129
      %v2134 = vpack.c.b16 %v2132, %v2131
      %2135 = vrot.lane.b32.xlu0 %v1084, 92
      %v2136 = vpop.permute.xlu0 %2135
      %2137 = vrot.lane.b32.xlu0 %v1073, 92
      %v2138 = vpop.permute.xlu0 %2137
      %2139 = vrot.lane.b32.xlu0 %v1096, 92
      %v2140 = vpop.permute.xlu0 %2139
      %2141 = vrot.lane.b32.xlu0 %v1087, 92
      %v2142 = vpop.permute.xlu0 %2141
      %2143 = vrot.lane.b32.xlu0 %v1074, 92
      %v2144 = vpop.permute.xlu0 %2143
      %2145 = vrot.lane.b32.xlu0 %v1099, 92
      %v2146 = vpop.permute.xlu0 %2145
      %2147 = vrot.lane.b32.xlu0 %v1090, 92
      %v2148 = vpop.permute.xlu0 %2147
      %2149 = vrot.lane.b32.xlu0 %v1075, 92
      %v2150 = vpop.permute.xlu0 %2149
      %2151 = vrot.lane.b32.xlu0 %v1102, 92
      %v2152 = vpop.permute.xlu0 %2151
      %2153 = vrot.lane.b32.xlu0 %v1093, 92
      %v2154 = vpop.permute.xlu0 %2153
      %2155 = vrot.lane.b32.xlu0 %v1076, 92
      %v2156 = vpop.permute.xlu0 %2155
      %2157 = vrot.lane.b32.xlu0 %v1105, 92
      %v2158 = vpop.permute.xlu0 %2157
      %vm2159 = vcmask 752640
      %v2160 = vsel %vm2159, %v2136, %v2138
      %v2161 = vsel %vm2159, %v2138, %v2140
      %v2162 = vsel %vm2159, %v2142, %v2144
      %v2163 = vsel %vm2159, %v2144, %v2146
      %v2164 = vsel %vm2159, %v2148, %v2150
      %v2165 = vsel %vm2159, %v2150, %v2152
      %v2166 = vsel %vm2159, %v2154, %v2156
      %v2167 = vsel %vm2159, %v2156, %v2158
      %v2181 = vsel %vm1178, %v2133, 0
      %v2184 = vsel %vm1178, %v2134, 0
      %2186 = vmatprep.subr.bf16.mxu0 %v2161
      %2187 = vmatpush1.bf16.msra.mxu0 %v2160
      %2188 = vmatprep.subr.bf16.mxu0 %v2163
      %2189 = vmatpush1.bf16.msra.mxu0 %v2162
      %2190 = vmatprep.subr.bf16.mxu0 %v2165
      %2191 = vmatpush1.bf16.msra.mxu0 %v2164
      %2192 = vmatprep.subr.bf16.mxu0 %v2167
      %2193 = vmatpush1.bf16.msra.mxu0 %v2166
      %2194 = vmatprep.subr.bf16.mxu0 0
      %2195 = vmatpush1.bf16.msra.mxu0 0
      %2196 = vmatprep.subr.bf16.mxu0 0
      %2197 = vmatpush1.bf16.msra.mxu0 0
      %2198 = vmatprep.subr.bf16.mxu0 0
      %2199 = vmatpush1.bf16.msra.mxu0 0
      %2200 = vmatprep.subr.bf16.mxu0 0
      %2201 = vmatpush1.bf16.msra.mxu0 0
      %2202 = vmatprep.subr.bf16.mxu0 0
      %2203 = vmatpush1.bf16.msra.mxu0 0
      %2204 = vmatprep.subr.bf16.mxu0 0
      %2205 = vmatpush1.bf16.msra.mxu0 0
      %2206 = vmatprep.subr.bf16.mxu0 0
      %2207 = vmatpush1.bf16.msra.mxu0 0
      %2208 = vmatprep.subr.bf16.mxu0 0
      %2209 = vmatpush1.bf16.msra.mxu0 0
      %2210 = vmatprep.subr.bf16.mxu0 0
      %2211 = vmatpush1.bf16.msra.mxu0 0
      %2212 = vmatprep.subr.bf16.mxu0 0
      %2213 = vmatpush1.bf16.msra.mxu0 0
      %2214 = vmatprep.subr.bf16.mxu0 0
      %2215 = vmatpush1.bf16.msra.mxu0 0
      %2216 = vmatprep.subr.bf16.mxu0 0
      %2217 = vmatpush1.bf16.msra.mxu0 0
      %2218 = vmatprep.mubr.bf16.mxu0 0
      %2219 = vmatmul.mubr.bf16.gmra.mrb[0].mxu0 %v2181
      %v2220 = vpop.f32.mrb[0].mxu0
      %v2221 = vadd.f32 0.0, %v2220
      %v2222 = vpop.f32.mrb[0].mxu0
      %v2223 = vadd.f32 0.0, %v2222
      %v2224 = vpop.f32.mrb[0].mxu0
      %v2225 = vadd.f32 0.0, %v2224
      %v2226 = vpop.f32.mrb[0].mxu0
      %v2227 = vadd.f32 0.0, %v2226
      %2228 = vmatprep.mubr.bf16.mxu0 0
      %2229 = vmatmul.mubr.bf16.gmra.mrb[0].mxu0 %v2184
      %v2230 = vpop.f32.mrb[0].mxu0
      %v2231 = vadd.f32 0.0, %v2230
      %v2232 = vpop.f32.mrb[0].mxu0
      %v2233 = vadd.f32 0.0, %v2232
      %v2234 = vpop.f32.mrb[0].mxu0
      %v2235 = vadd.f32 0.0, %v2234
      %v2236 = vpop.f32.mrb[0].mxu0
      %v2237 = vadd.f32 0.0, %v2236
      %2238 = vdwg.mxu0
      %2239 = vmatprep.subr.bf16.mxu0 0
      %2240 = vmatpush1.bf16.msra.mxu0 %v2140
      %2241 = vmatprep.subr.bf16.mxu0 0
      %2242 = vmatpush1.bf16.msra.mxu0 %v2146
      %2243 = vmatprep.subr.bf16.mxu0 0
      %2244 = vmatpush1.bf16.msra.mxu0 %v2152
      %2245 = vmatprep.subr.bf16.mxu0 0
      %2246 = vmatpush1.bf16.msra.mxu0 %v2158
      %2247 = vmatprep.subr.bf16.mxu0 0
      %2248 = vmatpush1.bf16.msra.mxu0 0
      %2249 = vmatprep.subr.bf16.mxu0 0
      %2250 = vmatpush1.bf16.msra.mxu0 0
      %2251 = vmatprep.subr.bf16.mxu0 0
      %2252 = vmatpush1.bf16.msra.mxu0 0
      %2253 = vmatprep.subr.bf16.mxu0 0
      %2254 = vmatpush1.bf16.msra.mxu0 0
      %2255 = vmatprep.subr.bf16.mxu0 0
      %2256 = vmatpush1.bf16.msra.mxu0 0
      %2257 = vmatprep.subr.bf16.mxu0 0
      %2258 = vmatpush1.bf16.msra.mxu0 0
      %2259 = vmatprep.subr.bf16.mxu0 0
      %2260 = vmatpush1.bf16.msra.mxu0 0
      %2261 = vmatprep.subr.bf16.mxu0 0
      %2262 = vmatpush1.bf16.msra.mxu0 0
      %2263 = vmatprep.subr.bf16.mxu0 0
      %2264 = vmatpush1.bf16.msra.mxu0 0
      %2265 = vmatprep.subr.bf16.mxu0 0
      %2266 = vmatpush1.bf16.msra.mxu0 0
      %2267 = vmatprep.subr.bf16.mxu0 0
      %2268 = vmatpush1.bf16.msra.mxu0 0
      %2269 = vmatprep.subr.bf16.mxu0 0
      %2270 = vmatpush1.bf16.msra.mxu0 0
      %2271 = vmatprep.mubr.bf16.mxu0 0
      %2272 = vmatmul.mubr.bf16.gmra.mrb[0].mxu0 %v2181
      %v2273 = vpop.f32.mrb[0].mxu0
      %v2274 = vadd.f32 0.0, %v2273
      %v2275 = vpop.f32.mrb[0].mxu0
      %v2276 = vpop.f32.mrb[0].mxu0
      %v2277 = vadd.f32 0.0, %v2276
      %v2278 = vpop.f32.mrb[0].mxu0
      %2279 = vmatprep.mubr.bf16.mxu0 0
      %2280 = vmatmul.mubr.bf16.gmra.mrb[0].mxu0 %v2184
      %v2281 = vpop.f32.mrb[0].mxu0
      %v2282 = vadd.f32 0.0, %v2281
      %v2283 = vpop.f32.mrb[0].mxu0
      %v2284 = vpop.f32.mrb[0].mxu0
      %v2285 = vadd.f32 0.0, %v2284
      %v2286 = vpop.f32.mrb[0].mxu0
      %2287 = vdwg.mxu0
      %v2288 = vadd.f32 %v2109, %v2221
      %v2289 = vadd.f32 %v2110, %v2223
      %v2290 = vadd.f32 %v2111, %v2274
      %v2291 = vadd.f32 %v2112, %v2225
      %v2292 = vadd.f32 %v2113, %v2227
      %v2293 = vadd.f32 %v2114, %v2277
      %v2294 = vadd.f32 %v2115, %v2231
      %v2295 = vadd.f32 %v2116, %v2233
      %v2296 = vadd.f32 %v2117, %v2282
      %v2297 = vadd.f32 %v2118, %v2235
      %v2298 = vadd.f32 %v2119, %v2237
      %v2299 = vadd.f32 %v2120, %v2285
      %v2300 = vld [vmem:[%s3 + $0x70] sm:$0xf]
      %v2301 = vld [vmem:[%s3 + $0x74] sm:$0xf]
      %v2302 = vld [vmem:[%s3 + $0x78] sm:$0xf]
      %v2303 = vld [vmem:[%s3 + $0x7c] sm:$0xf]
      %v2308 = vunpack.c.l.b16 %v2300
      %v2309 = vunpack.c.l.b16 %v2301
      %v2310 = vunpack.c.l.b16 %v2302
      %v2311 = vunpack.c.l.b16 %v2303
      %v2312 = vpack.c.b16 %v2309, %v2308
      %v2313 = vpack.c.b16 %v2311, %v2310
      %2314 = vrot.lane.b32.xlu0 %v1084, 91
      %v2315 = vpop.permute.xlu0 %2314
      %2316 = vrot.lane.b32.xlu0 %v1073, 91
      %v2317 = vpop.permute.xlu0 %2316
      %2318 = vrot.lane.b32.xlu0 %v1096, 91
      %v2319 = vpop.permute.xlu0 %2318
      %2320 = vrot.lane.b32.xlu0 %v1087, 91
      %v2321 = vpop.permute.xlu0 %2320
      %2322 = vrot.lane.b32.xlu0 %v1074, 91
      %v2323 = vpop.permute.xlu0 %2322
      %2324 = vrot.lane.b32.xlu0 %v1099, 91
      %v2325 = vpop.permute.xlu0 %2324
      %2326 = vrot.lane.b32.xlu0 %v1090, 91
      %v2327 = vpop.permute.xlu0 %2326
      %2328 = vrot.lane.b32.xlu0 %v1075, 91
      %v2329 = vpop.permute.xlu0 %2328
      %2330 = vrot.lane.b32.xlu0 %v1102, 91
      %v2331 = vpop.permute.xlu0 %2330
      %2332 = vrot.lane.b32.xlu0 %v1093, 91
      %v2333 = vpop.permute.xlu0 %2332
      %2334 = vrot.lane.b32.xlu0 %v1076, 91
      %v2335 = vpop.permute.xlu0 %2334
      %2336 = vrot.lane.b32.xlu0 %v1105, 91
      %v2337 = vpop.permute.xlu0 %2336
      %vm2338 = vcmask 744448
      %v2339 = vsel %vm2338, %v2315, %v2317
      %v2340 = vsel %vm2338, %v2317, %v2319
      %v2341 = vsel %vm2338, %v2321, %v2323
      %v2342 = vsel %vm2338, %v2323, %v2325
      %v2343 = vsel %vm2338, %v2327, %v2329
      %v2344 = vsel %vm2338, %v2329, %v2331
      %v2345 = vsel %vm2338, %v2333, %v2335
      %v2346 = vsel %vm2338, %v2335, %v2337
      %v2360 = vsel %vm1178, %v2312, 0
      %v2363 = vsel %vm1178, %v2313, 0
      %2365 = vmatprep.subr.bf16.mxu0 %v2340
      %2366 = vmatpush1.bf16.msra.mxu0 %v2339
      %2367 = vmatprep.subr.bf16.mxu0 %v2342
      %2368 = vmatpush1.bf16.msra.mxu0 %v2341
      %2369 = vmatprep.subr.bf16.mxu0 %v2344
      %2370 = vmatpush1.bf16.msra.mxu0 %v2343
      %2371 = vmatprep.subr.bf16.mxu0 %v2346
      %2372 = vmatpush1.bf16.msra.mxu0 %v2345
      %2373 = vmatprep.subr.bf16.mxu0 0
      %2374 = vmatpush1.bf16.msra.mxu0 0
      %2375 = vmatprep.subr.bf16.mxu0 0
      %2376 = vmatpush1.bf16.msra.mxu0 0
      %2377 = vmatprep.subr.bf16.mxu0 0
      %2378 = vmatpush1.bf16.msra.mxu0 0
      %2379 = vmatprep.subr.bf16.mxu0 0
      %2380 = vmatpush1.bf16.msra.mxu0 0
      %2381 = vmatprep.subr.bf16.mxu0 0
      %2382 = vmatpush1.bf16.msra.mxu0 0
      %2383 = vmatprep.subr.bf16.mxu0 0
      %2384 = vmatpush1.bf16.msra.mxu0 0
      %2385 = vmatprep.subr.bf16.mxu0 0
      %2386 = vmatpush1.bf16.msra.mxu0 0
      %2387 = vmatprep.subr.bf16.mxu0 0
      %2388 = vmatpush1.bf16.msra.mxu0 0
      %2389 = vmatprep.subr.bf16.mxu0 0
      %2390 = vmatpush1.bf16.msra.mxu0 0
      %2391 = vmatprep.subr.bf16.mxu0 0
      %2392 = vmatpush1.bf16.msra.mxu0 0
      %2393 = vmatprep.subr.bf16.mxu0 0
      %2394 = vmatpush1.bf16.msra.mxu0 0
      %2395 = vmatprep.subr.bf16.mxu0 0
      %2396 = vmatpush1.bf16.msra.mxu0 0
      %2397 = vmatprep.mubr.bf16.mxu0 0
      %2398 = vmatmul.mubr.bf16.gmra.mrb[0].mxu0 %v2360
      %v2399 = vpop.f32.mrb[0].mxu0
      %v2400 = vadd.f32 0.0, %v2399
      %v2401 = vpop.f32.mrb[0].mxu0
      %v2402 = vadd.f32 0.0, %v2401
      %v2403 = vpop.f32.mrb[0].mxu0
      %v2404 = vadd.f32 0.0, %v2403
      %v2405 = vpop.f32.mrb[0].mxu0
      %v2406 = vadd.f32 0.0, %v2405
      %2407 = vmatprep.mubr.bf16.mxu0 0
      %2408 = vmatmul.mubr.bf16.gmra.mrb[0].mxu0 %v2363
      %v2409 = vpop.f32.mrb[0].mxu0
      %v2410 = vadd.f32 0.0, %v2409
      %v2411 = vpop.f32.mrb[0].mxu0
      %v2412 = vadd.f32 0.0, %v2411
      %v2413 = vpop.f32.mrb[0].mxu0
      %v2414 = vadd.f32 0.0, %v2413
      %v2415 = vpop.f32.mrb[0].mxu0
      %v2416 = vadd.f32 0.0, %v2415
      %2417 = vdwg.mxu0
      %2418 = vmatprep.subr.bf16.mxu0 0
      %2419 = vmatpush1.bf16.msra.mxu0 %v2319
      %2420 = vmatprep.subr.bf16.mxu0 0
      %2421 = vmatpush1.bf16.msra.mxu0 %v2325
      %2422 = vmatprep.subr.bf16.mxu0 0
      %2423 = vmatpush1.bf16.msra.mxu0 %v2331
      %2424 = vmatprep.subr.bf16.mxu0 0
      %2425 = vmatpush1.bf16.msra.mxu0 %v2337
      %2426 = vmatprep.subr.bf16.mxu0 0
      %2427 = vmatpush1.bf16.msra.mxu0 0
      %2428 = vmatprep.subr.bf16.mxu0 0
      %2429 = vmatpush1.bf16.msra.mxu0 0
      %2430 = vmatprep.subr.bf16.mxu0 0
      %2431 = vmatpush1.bf16.msra.mxu0 0
      %2432 = vmatprep.subr.bf16.mxu0 0
      %2433 = vmatpush1.bf16.msra.mxu0 0
      %2434 = vmatprep.subr.bf16.mxu0 0
      %2435 = vmatpush1.bf16.msra.mxu0 0
      %2436 = vmatprep.subr.bf16.mxu0 0
      %2437 = vmatpush1.bf16.msra.mxu0 0
      %2438 = vmatprep.subr.bf16.mxu0 0
      %2439 = vmatpush1.bf16.msra.mxu0 0
      %2440 = vmatprep.subr.bf16.mxu0 0
      %2441 = vmatpush1.bf16.msra.mxu0 0
      %2442 = vmatprep.subr.bf16.mxu0 0
      %2443 = vmatpush1.bf16.msra.mxu0 0
      %2444 = vmatprep.subr.bf16.mxu0 0
      %2445 = vmatpush1.bf16.msra.mxu0 0
      %2446 = vmatprep.subr.bf16.mxu0 0
      %2447 = vmatpush1.bf16.msra.mxu0 0
      %2448 = vmatprep.subr.bf16.mxu0 0
      %2449 = vmatpush1.bf16.msra.mxu0 0
      %2450 = vmatprep.mubr.bf16.mxu0 0
      %2451 = vmatmul.mubr.bf16.gmra.mrb[0].mxu0 %v2360
      %v2452 = vpop.f32.mrb[0].mxu0
      %v2453 = vadd.f32 0.0, %v2452
      %v2454 = vpop.f32.mrb[0].mxu0
      %v2455 = vpop.f32.mrb[0].mxu0
      %v2456 = vadd.f32 0.0, %v2455
      %v2457 = vpop.f32.mrb[0].mxu0
      %2458 = vmatprep.mubr.bf16.mxu0 0
      %2459 = vmatmul.mubr.bf16.gmra.mrb[0].mxu0 %v2363
      %v2460 = vpop.f32.mrb[0].mxu0
      %v2461 = vadd.f32 0.0, %v2460
      %v2462 = vpop.f32.mrb[0].mxu0
      %v2463 = vpop.f32.mrb[0].mxu0
      %v2464 = vadd.f32 0.0, %v2463
      %v2465 = vpop.f32.mrb[0].mxu0
      %2466 = vdwg.mxu0
      %v2467 = vadd.f32 %v2288, %v2400
      %v2468 = vadd.f32 %v2289, %v2402
      %v2469 = vadd.f32 %v2290, %v2453
      %v2470 = vadd.f32 %v2291, %v2404
      %v2471 = vadd.f32 %v2292, %v2406
      %v2472 = vadd.f32 %v2293, %v2456
      %v2473 = vadd.f32 %v2294, %v2410
      %v2474 = vadd.f32 %v2295, %v2412
      %v2475 = vadd.f32 %v2296, %v2461
      %v2476 = vadd.f32 %v2297, %v2414
      %v2477 = vadd.f32 %v2298, %v2416
      %v2478 = vadd.f32 %v2299, %v2464
      %v2479 = vld [vmem:[%s3 + $0x80] sm:$0xf]
      %v2480 = vld [vmem:[%s3 + $0x84] sm:$0xf]
      %v2481 = vld [vmem:[%s3 + $0x88] sm:$0xf]
      %v2482 = vld [vmem:[%s3 + $0x8c] sm:$0xf]
      %v2487 = vunpack.c.l.b16 %v2479
      %v2488 = vunpack.c.l.b16 %v2480
      %v2489 = vunpack.c.l.b16 %v2481
      %v2490 = vunpack.c.l.b16 %v2482
      %v2491 = vpack.c.b16 %v2488, %v2487
      %v2492 = vpack.c.b16 %v2490, %v2489
      %2493 = vrot.lane.b32.xlu0 %v1084, 90
      %v2494 = vpop.permute.xlu0 %2493
      %2495 = vrot.lane.b32.xlu0 %v1073, 90
      %v2496 = vpop.permute.xlu0 %2495
      %2497 = vrot.lane.b32.xlu0 %v1096, 90
      %v2498 = vpop.permute.xlu0 %2497
      %2499 = vrot.lane.b32.xlu0 %v1087, 90
      %v2500 = vpop.permute.xlu0 %2499
      %2501 = vrot.lane.b32.xlu0 %v1074, 90
      %v2502 = vpop.permute.xlu0 %2501
      %2503 = vrot.lane.b32.xlu0 %v1099, 90
      %v2504 = vpop.permute.xlu0 %2503
      %2505 = vrot.lane.b32.xlu0 %v1090, 90
      %v2506 = vpop.permute.xlu0 %2505
      %2507 = vrot.lane.b32.xlu0 %v1075, 90
      %v2508 = vpop.permute.xlu0 %2507
      %2509 = vrot.lane.b32.xlu0 %v1102, 90
      %v2510 = vpop.permute.xlu0 %2509
      %2511 = vrot.lane.b32.xlu0 %v1093, 90
      %v2512 = vpop.permute.xlu0 %2511
      %2513 = vrot.lane.b32.xlu0 %v1076, 90
      %v2514 = vpop.permute.xlu0 %2513
      %2515 = vrot.lane.b32.xlu0 %v1105, 90
      %v2516 = vpop.permute.xlu0 %2515
      %vm2517 = vcmask 736256
      %v2518 = vsel %vm2517, %v2494, %v2496
      %v2519 = vsel %vm2517, %v2496, %v2498
      %v2520 = vsel %vm2517, %v2500, %v2502
      %v2521 = vsel %vm2517, %v2502, %v2504
      %v2522 = vsel %vm2517, %v2506, %v2508
      %v2523 = vsel %vm2517, %v2508, %v2510
      %v2524 = vsel %vm2517, %v2512, %v2514
      %v2525 = vsel %vm2517, %v2514, %v2516
      %v2539 = vsel %vm1178, %v2491, 0
      %v2542 = vsel %vm1178, %v2492, 0
      %2544 = vmatprep.subr.bf16.mxu0 %v2519
      %2545 = vmatpush1.bf16.msra.mxu0 %v2518
      %2546 = vmatprep.subr.bf16.mxu0 %v2521
      %2547 = vmatpush1.bf16.msra.mxu0 %v2520
      %2548 = vmatprep.subr.bf16.mxu0 %v2523
      %2549 = vmatpush1.bf16.msra.mxu0 %v2522
      %2550 = vmatprep.subr.bf16.mxu0 %v2525
      %2551 = vmatpush1.bf16.msra.mxu0 %v2524
      %2552 = vmatprep.subr.bf16.mxu0 0
      %2553 = vmatpush1.bf16.msra.mxu0 0
      %2554 = vmatprep.subr.bf16.mxu0 0
      %2555 = vmatpush1.bf16.msra.mxu0 0
      %2556 = vmatprep.subr.bf16.mxu0 0
      %2557 = vmatpush1.bf16.msra.mxu0 0
      %2558 = vmatprep.subr.bf16.mxu0 0
      %2559 = vmatpush1.bf16.msra.mxu0 0
      %2560 = vmatprep.subr.bf16.mxu0 0
      %2561 = vmatpush1.bf16.msra.mxu0 0
      %2562 = vmatprep.subr.bf16.mxu0 0
      %2563 = vmatpush1.bf16.msra.mxu0 0
      %2564 = vmatprep.subr.bf16.mxu0 0
      %2565 = vmatpush1.bf16.msra.mxu0 0
      %2566 = vmatprep.subr.bf16.mxu0 0
      %2567 = vmatpush1.bf16.msra.mxu0 0
      %2568 = vmatprep.subr.bf16.mxu0 0
      %2569 = vmatpush1.bf16.msra.mxu0 0
      %2570 = vmatprep.subr.bf16.mxu0 0
      %2571 = vmatpush1.bf16.msra.mxu0 0
      %2572 = vmatprep.subr.bf16.mxu0 0
      %2573 = vmatpush1.bf16.msra.mxu0 0
      %2574 = vmatprep.subr.bf16.mxu0 0
      %2575 = vmatpush1.bf16.msra.mxu0 0
      %2576 = vmatprep.mubr.bf16.mxu0 0
      %2577 = vmatmul.mubr.bf16.gmra.mrb[0].mxu0 %v2539
      %v2578 = vpop.f32.mrb[0].mxu0
      %v2579 = vadd.f32 0.0, %v2578
      %v2580 = vpop.f32.mrb[0].mxu0
      %v2581 = vadd.f32 0.0, %v2580
      %v2582 = vpop.f32.mrb[0].mxu0
      %v2583 = vadd.f32 0.0, %v2582
      %v2584 = vpop.f32.mrb[0].mxu0
      %v2585 = vadd.f32 0.0, %v2584
      %2586 = vmatprep.mubr.bf16.mxu0 0
      %2587 = vmatmul.mubr.bf16.gmra.mrb[0].mxu0 %v2542
      %v2588 = vpop.f32.mrb[0].mxu0
      %v2589 = vadd.f32 0.0, %v2588
      %v2590 = vpop.f32.mrb[0].mxu0
      %v2591 = vadd.f32 0.0, %v2590
      %v2592 = vpop.f32.mrb[0].mxu0
      %v2593 = vadd.f32 0.0, %v2592
      %v2594 = vpop.f32.mrb[0].mxu0
      %v2595 = vadd.f32 0.0, %v2594
      %2596 = vdwg.mxu0
      %2597 = vmatprep.subr.bf16.mxu0 0
      %2598 = vmatpush1.bf16.msra.mxu0 %v2498
      %2599 = vmatprep.subr.bf16.mxu0 0
      %2600 = vmatpush1.bf16.msra.mxu0 %v2504
      %2601 = vmatprep.subr.bf16.mxu0 0
      %2602 = vmatpush1.bf16.msra.mxu0 %v2510
      %2603 = vmatprep.subr.bf16.mxu0 0
      %2604 = vmatpush1.bf16.msra.mxu0 %v2516
      %2605 = vmatprep.subr.bf16.mxu0 0
      %2606 = vmatpush1.bf16.msra.mxu0 0
      %2607 = vmatprep.subr.bf16.mxu0 0
      %2608 = vmatpush1.bf16.msra.mxu0 0
      %2609 = vmatprep.subr.bf16.mxu0 0
      %2610 = vmatpush1.bf16.msra.mxu0 0
      %2611 = vmatprep.subr.bf16.mxu0 0
      %2612 = vmatpush1.bf16.msra.mxu0 0
      %2613 = vmatprep.subr.bf16.mxu0 0
      %2614 = vmatpush1.bf16.msra.mxu0 0
      %2615 = vmatprep.subr.bf16.mxu0 0
      %2616 = vmatpush1.bf16.msra.mxu0 0
      %2617 = vmatprep.subr.bf16.mxu0 0
      %2618 = vmatpush1.bf16.msra.mxu0 0
      %2619 = vmatprep.subr.bf16.mxu0 0
      %2620 = vmatpush1.bf16.msra.mxu0 0
      %2621 = vmatprep.subr.bf16.mxu0 0
      %2622 = vmatpush1.bf16.msra.mxu0 0
      %2623 = vmatprep.subr.bf16.mxu0 0
      %2624 = vmatpush1.bf16.msra.mxu0 0
      %2625 = vmatprep.subr.bf16.mxu0 0
      %2626 = vmatpush1.bf16.msra.mxu0 0
      %2627 = vmatprep.subr.bf16.mxu0 0
      %2628 = vmatpush1.bf16.msra.mxu0 0
      %2629 = vmatprep.mubr.bf16.mxu0 0
      %2630 = vmatmul.mubr.bf16.gmra.mrb[0].mxu0 %v2539
      %v2631 = vpop.f32.mrb[0].mxu0
      %v2632 = vadd.f32 0.0, %v2631
      %v2633 = vpop.f32.mrb[0].mxu0
      %v2634 = vpop.f32.mrb[0].mxu0
      %v2635 = vadd.f32 0.0, %v2634
      %v2636 = vpop.f32.mrb[0].mxu0
      %2637 = vmatprep.mubr.bf16.mxu0 0
      %2638 = vmatmul.mubr.bf16.gmra.mrb[0].mxu0 %v2542
      %v2639 = vpop.f32.mrb[0].mxu0
      %v2640 = vadd.f32 0.0, %v2639
      %v2641 = vpop.f32.mrb[0].mxu0
      %v2642 = vpop.f32.mrb[0].mxu0
      %v2643 = vadd.f32 0.0, %v2642
      %v2644 = vpop.f32.mrb[0].mxu0
      %2645 = vdwg.mxu0
      %v2646 = vadd.f32 %v2467, %v2579
      %v2647 = vadd.f32 %v2468, %v2581
      %v2648 = vadd.f32 %v2469, %v2632
      %v2649 = vadd.f32 %v2470, %v2583
      %v2650 = vadd.f32 %v2471, %v2585
      %v2651 = vadd.f32 %v2472, %v2635
      %v2652 = vadd.f32 %v2473, %v2589
      %v2653 = vadd.f32 %v2474, %v2591
      %v2654 = vadd.f32 %v2475, %v2640
      %v2655 = vadd.f32 %v2476, %v2593
      %v2656 = vadd.f32 %v2477, %v2595
      %v2657 = vadd.f32 %v2478, %v2643
      %v2658 = vld [vmem:[%s4] sm:$0xff]
      %v2659 = vld [vmem:[%s4 + $0x8] sm:$0xff]
      %v2660 = vld [vmem:[%s4 + $0x10] sm:$0xff]
      %v2661 = vld [vmem:[%s4 + $0x18] sm:$0xff]
      %2663 = vset.pattern.permute.xlu0 0
      %2664 = vperm.xlu0 %2663, %v2658
      %v2665 = vpop.permute.xlu0 %2664
      %2668 = vset.pattern.permute.xlu0 0
      %2669 = vperm.xlu0 %2668, %v2659
      %v2670 = vpop.permute.xlu0 %2669
      %2673 = vset.pattern.permute.xlu0 0
      %2674 = vperm.xlu0 %2673, %v2660
      %v2675 = vpop.permute.xlu0 %2674
      %2678 = vset.pattern.permute.xlu0 0
      %2679 = vperm.xlu0 %2678, %v2661
      %v2680 = vpop.permute.xlu0 %2679
      %v2682 = vadd.f32 %v2646, %v2665
      %v2683 = vadd.f32 %v2647, %v2665
      %v2684 = vadd.f32 %v2648, %v2665
      %v2685 = vadd.f32 %v2649, %v2670
      %v2686 = vadd.f32 %v2650, %v2670
      %v2687 = vadd.f32 %v2651, %v2670
      %v2688 = vadd.f32 %v2652, %v2675
      %v2689 = vadd.f32 %v2653, %v2675
      %v2690 = vadd.f32 %v2654, %v2675
      %v2691 = vadd.f32 %v2655, %v2680
      %v2692 = vadd.f32 %v2656, %v2680
      %v2693 = vadd.f32 %v2657, %v2680
      %v2694 = vmax.f32 %v2682, 0.0
      %v2695 = vmax.f32 %v2683, 0.0
      %v2696 = vmax.f32 %v2684, 0.0
      %v2697 = vmax.f32 %v2685, 0.0
      %v2698 = vmax.f32 %v2686, 0.0
      %v2699 = vmax.f32 %v2687, 0.0
      %v2700 = vmax.f32 %v2688, 0.0
      %v2701 = vmax.f32 %v2689, 0.0
      %v2702 = vmax.f32 %v2690, 0.0
      %v2703 = vmax.f32 %v2691, 0.0
      %v2704 = vmax.f32 %v2692, 0.0
      %v2705 = vmax.f32 %v2693, 0.0
      %2706 = vst [vmem:[%s251] sm:$0xff] %v2694
      %2707 = vst [vmem:[%s251 + $0x8] sm:$0xff] %v2695
      %2708 = vst.msk [vmem:[%s251 + $0x10] sm:$0xff] %vm369, %v2696
      %2709 = vst [vmem:[%s251 + $0x18] sm:$0xff] %v2697
      %2710 = vst [vmem:[%s251 + $0x20] sm:$0xff] %v2698
      %2711 = vst.msk [vmem:[%s251 + $0x28] sm:$0xff] %vm369, %v2699
      %2712 = vst [vmem:[%s251 + $0x30] sm:$0xff] %v2700
      %2713 = vst [vmem:[%s251 + $0x38] sm:$0xff] %v2701
      %2714 = vst.msk [vmem:[%s251 + $0x40] sm:$0xff] %vm369, %v2702
      %2715 = vst [vmem:[%s251 + $0x48] sm:$0xff] %v2703
      %2716 = vst [vmem:[%s251 + $0x50] sm:$0xff] %v2704
      %2717 = vst.msk [vmem:[%s251 + $0x58] sm:$0xff] %vm369, %v2705
      %p2718 = scmp.lt.s32.totalorder %s17, 1
      %s2719 = scalar_select %p2718, %s17, 1
      %s2720 = smul.addr %s2719, 12
      %s2721 = smul.addr %s2720, 8
      %s2722 = scalar_lea.vmem %s6, %s2721
      // Predicated region
      $region45: #{g_forward.1} parent=43 // pred_check
        %p2723 = pneg %p166
      $region46: #{g_forward.1} parent=43 // pred_check_branch
        %2725 = sbr.rel (%p2723) target = $region48
      $region47: #{g_forward.1} parent=43 // pred_region
        _
      $region48: #{g_forward.1} parent=43 // pred_fallthru
        _
    $region44: #{g_forward.1} parent=5 // pred_fallthru
      _
    %p2726 = scmp.le.s32.totalorder 2, %s12
    // Predicated region
    $region49: #{g_forward.1} parent=5 // pred_check
      %p2727 = pneg %p2726
    $region50: #{g_forward.1} parent=5 // pred_check_branch
      %2729 = sbr.rel (%p2727) target = $region52
    $region51: #{g_forward.1} parent=5 // pred_region
      %s2730 = ssub.s32 %s12, 2
      // Predicated region
      $region53: #{g_forward.1} parent=51 // pred_check
        %p2731 = pneg %p172
      $region54: #{g_forward.1} parent=51 // pred_check_branch
        %2733 = sbr.rel (%p2731) target = $region56
      $region55: #{g_forward.1} parent=51 // pred_region
        %p2734 = scmp.lt.s32.totalorder %s18, 1
        %s2735 = scalar_select %p2734, %s18, 1
        %s2736 = smul.addr %s2735, 12
        %s2737 = smul.addr %s2736, 8
        %s2738 = scalar_lea.vmem %s6, %s2737
      $region56: #{g_forward.1} parent=51 // pred_fallthru
        _
    $region52: #{g_forward.1} parent=5 // pred_fallthru
      _
  $region6: #{g_forward.1} parent=0 // loop_footer
    %s16 = sadd.s32 1, %s12
  $region7: #{g_forward.1} parent=0 // loop_footer_branch
    %11 = sbr.rel target = $region3
  $region8: #{g_forward.1} parent=0 // loop_exit
    _

</llo_original>
